<compile_context>
chip_gen: v7x
topology: tpu7x:2x2x1
jax: 0.10.0
libtpu: 0.0.40
codegen_flags: <defaults>
</compile_context>

<pallas_src>
import functools

import jax
import jax.numpy as jnp
from jax import lax
from jax.experimental import pallas as pl
from jax.experimental.pallas import tpu as pltpu

LN_EPS = 1e-5  # PyTorch nn.LayerNorm default


# ----------------------------- in-kernel math ------------------------------
def _layernorm(x, g, b):
    """Row-wise LayerNorm, two-pass variance, f32 math."""
    xf = x.astype(jnp.float32)
    mu = jnp.mean(xf, axis=-1, keepdims=True)
    xc = xf - mu
    var = jnp.mean(xc * xc, axis=-1, keepdims=True)
    return xc * lax.rsqrt(var + LN_EPS) * g + b


def _gelu(x):
    # tanh-approx GELU (tanh -> EUP slot).  PyTorch nn.GELU() default is the
    # exact erf form; the tanh approximation deviates by ~1e-3 per element.
    # TODO(synk): switch to the erf form if exact PyTorch fidelity is required.
    return 0.5 * x * (1.0 + jnp.tanh(0.7978845608028654 * (x + 0.044715 * x * x * x)))


# -------------------------------- kernel ------------------------------------
def _block_kernel(q_ref, k_ref, gq_ref, bq_ref, gk_ref, bk_ref,
                  wq_ref, wkv_ref, wo_ref, bo_ref,
                  g2_ref, b2_ref, w1_ref, b1_ref, w2_ref, b2m_ref,
                  o_ref, *, num_heads):
    bb, N, C = q_ref.shape            # batch elements per grid step, query rows, dim
    S = k_ref.shape[1]
    hd = C // num_heads
    cdt = wq_ref.dtype                # matmul-operand (compute) dtype

    xq = q_ref[...].reshape(bb * N, C).astype(jnp.float32)     # residual (f32)
    xk = k_ref[...].reshape(bb * S, C)

    qn = _layernorm(xq, gq_ref[...], bq_ref[...])              # norm_q  (bb*N, C)
    kn = _layernorm(xk, gk_ref[...], bk_ref[...])              # norm_k  (bb*S, C)

    # Projections, batched over all rows in the block (M = bb*N / bb*S, K = C).
    # The attention scale is pre-folded into wq.
    q = jnp.dot(qn.astype(cdt), wq_ref[...], preferred_element_type=jnp.float32)
    kv = jnp.dot(kn.astype(cdt), wkv_ref[...], preferred_element_type=jnp.float32)
    k = kv[:, :C]
    v = kv[:, C:]

    # Multi-head attention.  Per-(batch, head) scores / softmax / PV; per-head
    # outputs are concatenated once so the output projection is a single
    # K = C matmul instead of num_heads K = hd matmuls.
    rows = []
    for bi in range(bb):                       # static unroll (bb is small)
        qb = q[bi * N:(bi + 1) * N]            # sublane-aligned slices (N, S mult of 8)
        kb = k[bi * S:(bi + 1) * S]
        vb = v[bi * S:(bi + 1) * S]
        heads = []
        for h in range(num_heads):             # static unroll (num_heads is small)
            sl = slice(h * hd, (h + 1) * hd)
            s = lax.dot_general(qb[:, sl].astype(cdt), kb[:, sl].astype(cdt),
                                (((1,), (1,)), ((), ())),
                                preferred_element_type=jnp.float32)        # (N, S)
            s = s - jnp.max(s, axis=-1, keepdims=True)
            p = jnp.exp(s)
            p = p * pl.reciprocal(jnp.sum(p, axis=-1, keepdims=True), approx=True)
            heads.append(jnp.dot(p.astype(cdt), vb[:, sl].astype(cdt),
                                 preferred_element_type=jnp.float32))      # (N, hd)
        rows.append(jnp.concatenate(heads, axis=-1))                       # (N, C)
    attn = rows[0] if bb == 1 else jnp.concatenate(rows, axis=0)           # (bb*N, C)

    # Output projection (single K=C matmul) + proj bias + residual.
    x1 = xq + bo_ref[...] + jnp.dot(attn.astype(cdt), wo_ref[...],
                                    preferred_element_type=jnp.float32)

    # MLP fused in (no HBM round trip of x1): norm2 -> fc1 -> GELU -> fc2 -> residual.
    xn = _layernorm(x1, g2_ref[...], b2_ref[...])
    h = jnp.dot(xn.astype(cdt), w1_ref[...],
                preferred_element_type=jnp.float32) + b1_ref[...]
    h = _gelu(h)
    y = jnp.dot(h.astype(cdt), w2_ref[...],
                preferred_element_type=jnp.float32) + b2m_ref[...]

    o_ref[...] = (x1 + y).reshape(bb, N, C).astype(o_ref.dtype)


# ------------------------------ wrappers ------------------------------------
_PARAM_ORDER = ("gq", "bq", "gk", "bk", "wq", "wkv", "wo", "bo",
                "g2", "b2", "w1", "b1", "w2", "b2m")


def prepare_params(p, *, num_heads, compute_dtype=jnp.bfloat16):
    """One-time weight preparation, hoisted out of the forward path."""
    C = p["wq"].shape[0]
    scale = (C // num_heads) ** (-0.5)
    row = lambda a: a.reshape(1, -1).astype(jnp.float32)
    cdt = compute_dtype
    return dict(
        gq=row(p["norm_q_g"]), bq=row(p["norm_q_b"]),
        gk=row(p["norm_k_g"]), bk=row(p["norm_k_b"]),
        wq=(p["wq"] * scale).astype(cdt),                          # scale folded in
        wkv=jnp.concatenate([p["wk"], p["wv"]], axis=1).astype(cdt),   # (C, 2C)
        wo=p["wo"].astype(cdt), bo=row(p["bo"]),
        g2=row(p["norm2_g"]), b2=row(p["norm2_b"]),
        w1=p["fc1_w"].astype(cdt), b1=row(p["fc1_b"]),
        w2=p["fc2_w"].astype(cdt), b2m=row(p["fc2_b"]),
    )


def _pick_batch_tile(B):
    """Largest divisor of B that still leaves >=2 grid steps (v7x has 2 TCs)."""
    for bb in range(max(B // 2, 1), 0, -1):
        if B % bb == 0:
            return bb
    return 1


def cross_attn_block(query, key, prep, *, num_heads, batch_tile=None):
    """CrossAttnBlock.forward(query, key) with post_norm=False, mask=None."""
    B, N, C = query.shape
    S = key.shape[1]
    bb = batch_tile if batch_tile is not None else _pick_batch_tile(B)
    assert B % bb == 0, (B, bb)

    weights = [prep[name] for name in _PARAM_ORDER]
    # Constant-index weight specs -> DMA'd once, VMEM resident across the grid.
    weight_specs = [pl.BlockSpec(w.shape, lambda i: (0, 0)) for w in weights]

    return pl.pallas_call(
        functools.partial(_block_kernel, num_heads=num_heads),
        out_shape=jax.ShapeDtypeStruct((B, N, C), query.dtype),
        grid=(B // bb,),
        in_specs=[
            pl.BlockSpec((bb, N, C), lambda i: (i, 0, 0)),   # query (native dtype)
            pl.BlockSpec((bb, S, C), lambda i: (i, 0, 0)),   # key   (native dtype)
        ] + weight_specs,
        out_specs=pl.BlockSpec((bb, N, C), lambda i: (i, 0, 0)),
        compiler_params=pltpu.CompilerParams(dimension_semantics=("parallel",)),
    )(query, key, *weights)


# ---------------------------- parameter setup -------------------------------
def init_params(key, *, dim, mlp_ratio=4):
    hidden = int(dim * mlp_ratio)
    ks = iter(jax.random.split(key, 16))

    def w(shape, s=0.02):
        return s * jax.random.normal(next(ks), shape, jnp.float32)

    def gamma(n):
        return 1.0 + 0.1 * jax.random.normal(next(ks), (n,), jnp.float32)

    def beta(n):
        return 0.1 * jax.random.normal(next(ks), (n,), jnp.float32)

    return dict(
        norm_q_g=gamma(dim), norm_q_b=beta(dim),
        norm_k_g=gamma(dim), norm_k_b=beta(dim),
        wq=w((dim, dim)), wk=w((dim, dim)), wv=w((dim, dim)),   # qkv_bias=False
        wo=w((dim, dim)), bo=beta(dim),                          # attn.proj (with bias)
        norm2_g=gamma(dim), norm2_b=beta(dim),
        fc1_w=w((dim, hidden)), fc1_b=beta(hidden),
        fc2_w=w((hidden, dim)), fc2_b=beta(dim),
    )


# --------------------------- pure-JAX reference -----------------------------
def ref_cross_attn_block(query, key, p, num_heads):
    def ln(x, g, b):
        mu = x.mean(-1, keepdims=True)
        var = ((x - mu) ** 2).mean(-1, keepdims=True)
        return (x - mu) / jnp.sqrt(var + LN_EPS) * g + b

    gelu = lambda x: jax.nn.gelu(x, approximate=False)   # PyTorch nn.GELU() default
    B, N, C = query.shape
    hd = C // num_heads
    scale = hd ** (-0.5)

    qn = ln(query, p["norm_q_g"], p["norm_q_b"])
    kn = ln(key, p["norm_k_g"], p["norm_k_b"])
    q = (qn @ p["wq"]).reshape(B, N, num_heads, hd).transpose(0, 2, 1, 3)
    k = (kn @ p["wk"]).reshape(B, -1, num_heads, hd).transpose(0, 2, 1, 3)
    v = (kn @ p["wv"]).reshape(B, -1, num_heads, hd).transpose(0, 2, 1, 3)
    attn = jax.nn.softmax(jnp.einsum("bhnc,bhsc->bhns", q, k) * scale, axis=-1)
    a = jnp.einsum("bhns,bhsc->bhnc", attn, v).transpose(0, 2, 1, 3).reshape(B, N, C)
    a = a @ p["wo"] + p["bo"]
    x1 = query + a
    m = gelu(ln(x1, p["norm2_g"], p["norm2_b"]) @ p["fc1_w"] + p["fc1_b"]) \
        @ p["fc2_w"] + p["fc2_b"]
    return x1 + m


# --------------------------------- main --------------------------------------
if __name__ == "__main__":
    num_heads = 4
    B, N, S, dim = 2, 8, 16, 128   # dim=128 -> lane-dense tiles

    root = jax.random.PRNGKey(0)
    kq, kk, kp = jax.random.split(root, 3)
    query = jax.random.normal(kq, (B, N, dim), jnp.float32)      # task tokens
    key_tok = jax.random.normal(kk, (B, S, dim), jnp.float32)    # image tokens
    params = init_params(kp, dim=dim, mlp_ratio=4)

    ref = ref_cross_attn_block(query, key_tok, params, num_heads)

    # Default path: bf16 matmul operands, f32 accumulators + f32 elementwise math.
    prep_bf16 = prepare_params(params, num_heads=num_heads)          # hoisted, once
    out = jax.block_until_ready(
        cross_attn_block(query, key_tok, prep_bf16, num_heads=num_heads))
    assert out.shape == (B, N, dim), out.shape
    assert bool(jnp.all(jnp.isfinite(out)))
    err_bf16 = float(jnp.max(jnp.abs(out - ref)))
    assert err_bf16 < 1e-1, f"bf16 mismatch vs pure-JAX reference: {err_bf16}"

    # f32 matmul path (tight check).
    prep_f32 = prepare_params(params, num_heads=num_heads, compute_dtype=jnp.float32)
    out_f32 = jax.block_until_ready(
        cross_attn_block(query, key_tok, prep_f32, num_heads=num_heads))
    err_f32 = float(jnp.max(jnp.abs(out_f32 - ref)))
    assert err_f32 < 2e-2, f"f32 mismatch vs pure-JAX reference: {err_f32}"

    # Exercise the batched path (batch_tile > 1): B=4 -> 2 grid steps x 2 batches.
    B4 = 4
    q4 = jax.random.normal(jax.random.PRNGKey(1), (B4, N, dim), jnp.float32)
    k4 = jax.random.normal(jax.random.PRNGKey(2), (B4, S, dim), jnp.float32)
    ref4 = ref_cross_attn_block(q4, k4, params, num_heads)
    out4 = jax.block_until_ready(
        cross_attn_block(q4, k4, prep_f32, num_heads=num_heads))
    err4 = float(jnp.max(jnp.abs(out4 - ref4)))
    assert err4 < 2e-2, f"batched-tile f32 mismatch vs reference: {err4}"

    print("KERNEL_OK")
</pallas_src>

<mosaic_0001>
module attributes {stable_mosaic.version = 11 : i64} {
  func.func @_block_kernel(%arg0: i32, %arg1: memref<1x8x128xf32, #tpu.memory_space<vmem>>, %arg2: memref<1x16x128xf32, #tpu.memory_space<vmem>>, %arg3: memref<1x128xf32, #tpu.memory_space<vmem>>, %arg4: memref<1x128xf32, #tpu.memory_space<vmem>>, %arg5: memref<1x128xf32, #tpu.memory_space<vmem>>, %arg6: memref<1x128xf32, #tpu.memory_space<vmem>>, %arg7: memref<128x128xbf16, #tpu.memory_space<vmem>>, %arg8: memref<128x256xbf16, #tpu.memory_space<vmem>>, %arg9: memref<128x128xbf16, #tpu.memory_space<vmem>>, %arg10: memref<1x128xf32, #tpu.memory_space<vmem>>, %arg11: memref<1x128xf32, #tpu.memory_space<vmem>>, %arg12: memref<1x128xf32, #tpu.memory_space<vmem>>, %arg13: memref<128x512xbf16, #tpu.memory_space<vmem>>, %arg14: memref<1x512xf32, #tpu.memory_space<vmem>>, %arg15: memref<512x128xbf16, #tpu.memory_space<vmem>>, %arg16: memref<1x128xf32, #tpu.memory_space<vmem>>, %arg17: memref<1x8x128xf32, #tpu.memory_space<vmem>>) attributes {dimension_semantics = [#tpu.dimension_semantics<parallel>], iteration_bounds = array<i64: 2>, scalar_prefetch = 0 : i64, scratch_operands = 0 : i64, tpu.core_type = #tpu.core_type<tc>, window_params = [{transform_indices = @transform_0, window_bounds = array<i64: 1, 8, 128>}, {transform_indices = @transform_1, window_bounds = array<i64: 1, 16, 128>}, {pipeline_mode = #tpu.pipeline_mode<synchronous>, transform_indices = @transform_2, window_bounds = array<i64: 1, 128>}, {pipeline_mode = #tpu.pipeline_mode<synchronous>, transform_indices = @transform_3, window_bounds = array<i64: 1, 128>}, {pipeline_mode = #tpu.pipeline_mode<synchronous>, transform_indices = @transform_4, window_bounds = array<i64: 1, 128>}, {pipeline_mode = #tpu.pipeline_mode<synchronous>, transform_indices = @transform_5, window_bounds = array<i64: 1, 128>}, {pipeline_mode = #tpu.pipeline_mode<synchronous>, transform_indices = @transform_6, window_bounds = array<i64: 128, 128>}, {pipeline_mode = #tpu.pipeline_mode<synchronous>, transform_indices = @transform_7, window_bounds = array<i64: 128, 256>}, {pipeline_mode = #tpu.pipeline_mode<synchronous>, transform_indices = @transform_8, window_bounds = array<i64: 128, 128>}, {pipeline_mode = #tpu.pipeline_mode<synchronous>, transform_indices = @transform_9, window_bounds = array<i64: 1, 128>}, {pipeline_mode = #tpu.pipeline_mode<synchronous>, transform_indices = @transform_10, window_bounds = array<i64: 1, 128>}, {pipeline_mode = #tpu.pipeline_mode<synchronous>, transform_indices = @transform_11, window_bounds = array<i64: 1, 128>}, {pipeline_mode = #tpu.pipeline_mode<synchronous>, transform_indices = @transform_12, window_bounds = array<i64: 128, 512>}, {pipeline_mode = #tpu.pipeline_mode<synchronous>, transform_indices = @transform_13, window_bounds = array<i64: 1, 512>}, {pipeline_mode = #tpu.pipeline_mode<synchronous>, transform_indices = @transform_14, window_bounds = array<i64: 512, 128>}, {pipeline_mode = #tpu.pipeline_mode<synchronous>, transform_indices = @transform_15, window_bounds = array<i64: 1, 128>}, {transform_indices = @transform_16, window_bounds = array<i64: 1, 8, 128>}]} {
    %c0 = arith.constant 0 : index
    %c0_0 = arith.constant 0 : index
    %c0_1 = arith.constant 0 : index
    %0 = vector.load %arg1[%c0, %c0_0, %c0_1] : memref<1x8x128xf32, #tpu.memory_space<vmem>>, vector<1x8x128xf32>
    %1 = vector.shape_cast %0 : vector<1x8x128xf32> to vector<8x128xf32>
    %c0_2 = arith.constant 0 : index
    %c0_3 = arith.constant 0 : index
    %c0_4 = arith.constant 0 : index
    %2 = vector.load %arg2[%c0_2, %c0_3, %c0_4] : memref<1x16x128xf32, #tpu.memory_space<vmem>>, vector<1x16x128xf32>
    %3 = vector.shape_cast %2 : vector<1x16x128xf32> to vector<16x128xf32>
    %c0_5 = arith.constant 0 : index
    %c0_6 = arith.constant 0 : index
    %4 = vector.load %arg3[%c0_5, %c0_6] : memref<1x128xf32, #tpu.memory_space<vmem>>, vector<1x128xf32>
    %c0_7 = arith.constant 0 : index
    %c0_8 = arith.constant 0 : index
    %5 = vector.load %arg4[%c0_7, %c0_8] : memref<1x128xf32, #tpu.memory_space<vmem>>, vector<1x128xf32>
    %cst = arith.constant dense<0.000000e+00> : vector<8xf32>
    %6 = vector.multi_reduction <add>, %1, %cst [1] : vector<8x128xf32> to vector<8xf32>
    %7 = vector.shape_cast %6 : vector<8xf32> to vector<8x1xf32>
    %cst_9 = arith.constant 1.280000e+02 : f32
    %8 = vector.broadcast %cst_9 : f32 to vector<8x1xf32>
    %9 = arith.divf %7, %8 : vector<8x1xf32>
    %10 = vector.broadcast %9 : vector<8x1xf32> to vector<8x128xf32>
    %11 = arith.subf %1, %10 : vector<8x128xf32>
    %12 = arith.mulf %11, %11 : vector<8x128xf32>
    %cst_10 = arith.constant dense<0.000000e+00> : vector<8xf32>
    %13 = vector.multi_reduction <add>, %12, %cst_10 [1] : vector<8x128xf32> to vector<8xf32>
    %14 = vector.shape_cast %13 : vector<8xf32> to vector<8x1xf32>
    %cst_11 = arith.constant 1.280000e+02 : f32
    %15 = vector.broadcast %cst_11 : f32 to vector<8x1xf32>
    %16 = arith.divf %14, %15 : vector<8x1xf32>
    %cst_12 = arith.constant 9.99999974E-6 : f32
    %17 = vector.broadcast %cst_12 : f32 to vector<8x1xf32>
    %18 = arith.addf %16, %17 : vector<8x1xf32>
    %19 = math.rsqrt %18 : vector<8x1xf32>
    %20 = vector.broadcast %19 : vector<8x1xf32> to vector<8x128xf32>
    %21 = arith.mulf %11, %20 : vector<8x128xf32>
    %22 = vector.broadcast %4 : vector<1x128xf32> to vector<8x128xf32>
    %23 = arith.mulf %21, %22 : vector<8x128xf32>
    %24 = vector.broadcast %5 : vector<1x128xf32> to vector<8x128xf32>
    %25 = arith.addf %23, %24 : vector<8x128xf32>
    %c0_13 = arith.constant 0 : index
    %c0_14 = arith.constant 0 : index
    %26 = vector.load %arg5[%c0_13, %c0_14] : memref<1x128xf32, #tpu.memory_space<vmem>>, vector<1x128xf32>
    %c0_15 = arith.constant 0 : index
    %c0_16 = arith.constant 0 : index
    %27 = vector.load %arg6[%c0_15, %c0_16] : memref<1x128xf32, #tpu.memory_space<vmem>>, vector<1x128xf32>
    %cst_17 = arith.constant dense<0.000000e+00> : vector<16xf32>
    %28 = vector.multi_reduction <add>, %3, %cst_17 [1] : vector<16x128xf32> to vector<16xf32>
    %29 = vector.shape_cast %28 : vector<16xf32> to vector<16x1xf32>
    %cst_18 = arith.constant 1.280000e+02 : f32
    %30 = vector.broadcast %cst_18 : f32 to vector<16x1xf32>
    %31 = arith.divf %29, %30 : vector<16x1xf32>
    %32 = vector.broadcast %31 : vector<16x1xf32> to vector<16x128xf32>
    %33 = arith.subf %3, %32 : vector<16x128xf32>
    %34 = arith.mulf %33, %33 : vector<16x128xf32>
    %cst_19 = arith.constant dense<0.000000e+00> : vector<16xf32>
    %35 = vector.multi_reduction <add>, %34, %cst_19 [1] : vector<16x128xf32> to vector<16xf32>
    %36 = vector.shape_cast %35 : vector<16xf32> to vector<16x1xf32>
    %cst_20 = arith.constant 1.280000e+02 : f32
    %37 = vector.broadcast %cst_20 : f32 to vector<16x1xf32>
    %38 = arith.divf %36, %37 : vector<16x1xf32>
    %cst_21 = arith.constant 9.99999974E-6 : f32
    %39 = vector.broadcast %cst_21 : f32 to vector<16x1xf32>
    %40 = arith.addf %38, %39 : vector<16x1xf32>
    %41 = math.rsqrt %40 : vector<16x1xf32>
    %42 = vector.broadcast %41 : vector<16x1xf32> to vector<16x128xf32>
    %43 = arith.mulf %33, %42 : vector<16x128xf32>
    %44 = vector.broadcast %26 : vector<1x128xf32> to vector<16x128xf32>
    %45 = arith.mulf %43, %44 : vector<16x128xf32>
    %46 = vector.broadcast %27 : vector<1x128xf32> to vector<16x128xf32>
    %47 = arith.addf %45, %46 : vector<16x128xf32>
    %48 = arith.truncf %25 : vector<8x128xf32> to vector<8x128xbf16>
    %c0_22 = arith.constant 0 : index
    %c0_23 = arith.constant 0 : index
    %49 = vector.load %arg7[%c0_22, %c0_23] : memref<128x128xbf16, #tpu.memory_space<vmem>>, vector<128x128xbf16>
    %cst_24 = arith.constant dense<0.000000e+00> : vector<8x128xf32>
    %50 = tpu.matmul %48, %49, %cst_24 {dimension_numbers = #tpu.dot_dimension_numbers<[1], [0], [0], [1], [0, 0, 1, 1], [], []>} : vector<8x128xbf16>, vector<128x128xbf16>, vector<8x128xf32> -> vector<8x128xf32>
    %51 = arith.truncf %47 : vector<16x128xf32> to vector<16x128xbf16>
    %c0_25 = arith.constant 0 : index
    %c0_26 = arith.constant 0 : index
    %52 = vector.load %arg8[%c0_25, %c0_26] : memref<128x256xbf16, #tpu.memory_space<vmem>>, vector<128x256xbf16>
    %cst_27 = arith.constant dense<0.000000e+00> : vector<16x256xf32>
    %53 = tpu.matmul %51, %52, %cst_27 {dimension_numbers = #tpu.dot_dimension_numbers<[1], [0], [0], [1], [0, 0, 1, 1], [], []>} : vector<16x128xbf16>, vector<128x256xbf16>, vector<16x256xf32> -> vector<16x256xf32>
    %54 = vector.extract_strided_slice %53 {offsets = [0, 0], sizes = [16, 128], strides = [1, 1]} : vector<16x256xf32> to vector<16x128xf32>
    %55 = vector.extract_strided_slice %53 {offsets = [0, 128], sizes = [16, 128], strides = [1, 1]} : vector<16x256xf32> to vector<16x128xf32>
    %56 = vector.extract_strided_slice %50 {offsets = [0, 0], sizes = [8, 32], strides = [1, 1]} : vector<8x128xf32> to vector<8x32xf32>
    %57 = arith.truncf %56 : vector<8x32xf32> to vector<8x32xbf16>
    %58 = vector.extract_strided_slice %54 {offsets = [0, 0], sizes = [16, 32], strides = [1, 1]} : vector<16x128xf32> to vector<16x32xf32>
    %59 = arith.truncf %58 : vector<16x32xf32> to vector<16x32xbf16>
    %cst_28 = arith.constant dense<0.000000e+00> : vector<8x16xf32>
    %60 = tpu.matmul %57, %59, %cst_28 {dimension_numbers = #tpu.dot_dimension_numbers<[1], [1], [0], [0], [0, 0, 1, 0], [], []>} : vector<8x32xbf16>, vector<16x32xbf16>, vector<8x16xf32> -> vector<8x16xf32>
    %cst_29 = arith.constant dense<0xFF800000> : vector<8xf32>
    %61 = vector.multi_reduction <maximumf>, %60, %cst_29 [1] : vector<8x16xf32> to vector<8xf32>
    %62 = vector.shape_cast %61 : vector<8xf32> to vector<8x1xf32>
    %63 = vector.broadcast %62 : vector<8x1xf32> to vector<8x16xf32>
    %64 = arith.subf %60, %63 : vector<8x16xf32>
    %65 = math.exp %64 : vector<8x16xf32>
    %cst_30 = arith.constant dense<0.000000e+00> : vector<8xf32>
    %66 = vector.multi_reduction <add>, %65, %cst_30 [1] : vector<8x16xf32> to vector<8xf32>
    %67 = vector.shape_cast %66 : vector<8xf32> to vector<8x1xf32>
    %68 = tpu.reciprocal %67 {approx = true} : vector<8x1xf32> -> vector<8x1xf32>
    %69 = vector.broadcast %68 : vector<8x1xf32> to vector<8x16xf32>
    %70 = arith.mulf %65, %69 : vector<8x16xf32>
    %71 = arith.truncf %70 : vector<8x16xf32> to vector<8x16xbf16>
    %72 = vector.extract_strided_slice %55 {offsets = [0, 0], sizes = [16, 32], strides = [1, 1]} : vector<16x128xf32> to vector<16x32xf32>
    %73 = arith.truncf %72 : vector<16x32xf32> to vector<16x32xbf16>
    %cst_31 = arith.constant dense<0.000000e+00> : vector<8x32xf32>
    %74 = tpu.matmul %71, %73, %cst_31 {dimension_numbers = #tpu.dot_dimension_numbers<[1], [0], [0], [1], [0, 0, 1, 1], [], []>} : vector<8x16xbf16>, vector<16x32xbf16>, vector<8x32xf32> -> vector<8x32xf32>
    %75 = vector.extract_strided_slice %50 {offsets = [0, 32], sizes = [8, 32], strides = [1, 1]} : vector<8x128xf32> to vector<8x32xf32>
    %76 = arith.truncf %75 : vector<8x32xf32> to vector<8x32xbf16>
    %77 = vector.extract_strided_slice %54 {offsets = [0, 32], sizes = [16, 32], strides = [1, 1]} : vector<16x128xf32> to vector<16x32xf32>
    %78 = arith.truncf %77 : vector<16x32xf32> to vector<16x32xbf16>
    %cst_32 = arith.constant dense<0.000000e+00> : vector<8x16xf32>
    %79 = tpu.matmul %76, %78, %cst_32 {dimension_numbers = #tpu.dot_dimension_numbers<[1], [1], [0], [0], [0, 0, 1, 0], [], []>} : vector<8x32xbf16>, vector<16x32xbf16>, vector<8x16xf32> -> vector<8x16xf32>
    %cst_33 = arith.constant dense<0xFF800000> : vector<8xf32>
    %80 = vector.multi_reduction <maximumf>, %79, %cst_33 [1] : vector<8x16xf32> to vector<8xf32>
    %81 = vector.shape_cast %80 : vector<8xf32> to vector<8x1xf32>
    %82 = vector.broadcast %81 : vector<8x1xf32> to vector<8x16xf32>
    %83 = arith.subf %79, %82 : vector<8x16xf32>
    %84 = math.exp %83 : vector<8x16xf32>
    %cst_34 = arith.constant dense<0.000000e+00> : vector<8xf32>
    %85 = vector.multi_reduction <add>, %84, %cst_34 [1] : vector<8x16xf32> to vector<8xf32>
    %86 = vector.shape_cast %85 : vector<8xf32> to vector<8x1xf32>
    %87 = tpu.reciprocal %86 {approx = true} : vector<8x1xf32> -> vector<8x1xf32>
    %88 = vector.broadcast %87 : vector<8x1xf32> to vector<8x16xf32>
    %89 = arith.mulf %84, %88 : vector<8x16xf32>
    %90 = arith.truncf %89 : vector<8x16xf32> to vector<8x16xbf16>
    %91 = vector.extract_strided_slice %55 {offsets = [0, 32], sizes = [16, 32], strides = [1, 1]} : vector<16x128xf32> to vector<16x32xf32>
    %92 = arith.truncf %91 : vector<16x32xf32> to vector<16x32xbf16>
    %cst_35 = arith.constant dense<0.000000e+00> : vector<8x32xf32>
    %93 = tpu.matmul %90, %92, %cst_35 {dimension_numbers = #tpu.dot_dimension_numbers<[1], [0], [0], [1], [0, 0, 1, 1], [], []>} : vector<8x16xbf16>, vector<16x32xbf16>, vector<8x32xf32> -> vector<8x32xf32>
    %94 = vector.extract_strided_slice %50 {offsets = [0, 64], sizes = [8, 32], strides = [1, 1]} : vector<8x128xf32> to vector<8x32xf32>
    %95 = arith.truncf %94 : vector<8x32xf32> to vector<8x32xbf16>
    %96 = vector.extract_strided_slice %54 {offsets = [0, 64], sizes = [16, 32], strides = [1, 1]} : vector<16x128xf32> to vector<16x32xf32>
    %97 = arith.truncf %96 : vector<16x32xf32> to vector<16x32xbf16>
    %cst_36 = arith.constant dense<0.000000e+00> : vector<8x16xf32>
    %98 = tpu.matmul %95, %97, %cst_36 {dimension_numbers = #tpu.dot_dimension_numbers<[1], [1], [0], [0], [0, 0, 1, 0], [], []>} : vector<8x32xbf16>, vector<16x32xbf16>, vector<8x16xf32> -> vector<8x16xf32>
    %cst_37 = arith.constant dense<0xFF800000> : vector<8xf32>
    %99 = vector.multi_reduction <maximumf>, %98, %cst_37 [1] : vector<8x16xf32> to vector<8xf32>
    %100 = vector.shape_cast %99 : vector<8xf32> to vector<8x1xf32>
    %101 = vector.broadcast %100 : vector<8x1xf32> to vector<8x16xf32>
    %102 = arith.subf %98, %101 : vector<8x16xf32>
    %103 = math.exp %102 : vector<8x16xf32>
    %cst_38 = arith.constant dense<0.000000e+00> : vector<8xf32>
    %104 = vector.multi_reduction <add>, %103, %cst_38 [1] : vector<8x16xf32> to vector<8xf32>
    %105 = vector.shape_cast %104 : vector<8xf32> to vector<8x1xf32>
    %106 = tpu.reciprocal %105 {approx = true} : vector<8x1xf32> -> vector<8x1xf32>
    %107 = vector.broadcast %106 : vector<8x1xf32> to vector<8x16xf32>
    %108 = arith.mulf %103, %107 : vector<8x16xf32>
    %109 = arith.truncf %108 : vector<8x16xf32> to vector<8x16xbf16>
    %110 = vector.extract_strided_slice %55 {offsets = [0, 64], sizes = [16, 32], strides = [1, 1]} : vector<16x128xf32> to vector<16x32xf32>
    %111 = arith.truncf %110 : vector<16x32xf32> to vector<16x32xbf16>
    %cst_39 = arith.constant dense<0.000000e+00> : vector<8x32xf32>
    %112 = tpu.matmul %109, %111, %cst_39 {dimension_numbers = #tpu.dot_dimension_numbers<[1], [0], [0], [1], [0, 0, 1, 1], [], []>} : vector<8x16xbf16>, vector<16x32xbf16>, vector<8x32xf32> -> vector<8x32xf32>
    %113 = vector.extract_strided_slice %50 {offsets = [0, 96], sizes = [8, 32], strides = [1, 1]} : vector<8x128xf32> to vector<8x32xf32>
    %114 = arith.truncf %113 : vector<8x32xf32> to vector<8x32xbf16>
    %115 = vector.extract_strided_slice %54 {offsets = [0, 96], sizes = [16, 32], strides = [1, 1]} : vector<16x128xf32> to vector<16x32xf32>
    %116 = arith.truncf %115 : vector<16x32xf32> to vector<16x32xbf16>
    %cst_40 = arith.constant dense<0.000000e+00> : vector<8x16xf32>
    %117 = tpu.matmul %114, %116, %cst_40 {dimension_numbers = #tpu.dot_dimension_numbers<[1], [1], [0], [0], [0, 0, 1, 0], [], []>} : vector<8x32xbf16>, vector<16x32xbf16>, vector<8x16xf32> -> vector<8x16xf32>
    %cst_41 = arith.constant dense<0xFF800000> : vector<8xf32>
    %118 = vector.multi_reduction <maximumf>, %117, %cst_41 [1] : vector<8x16xf32> to vector<8xf32>
    %119 = vector.shape_cast %118 : vector<8xf32> to vector<8x1xf32>
    %120 = vector.broadcast %119 : vector<8x1xf32> to vector<8x16xf32>
    %121 = arith.subf %117, %120 : vector<8x16xf32>
    %122 = math.exp %121 : vector<8x16xf32>
    %cst_42 = arith.constant dense<0.000000e+00> : vector<8xf32>
    %123 = vector.multi_reduction <add>, %122, %cst_42 [1] : vector<8x16xf32> to vector<8xf32>
    %124 = vector.shape_cast %123 : vector<8xf32> to vector<8x1xf32>
    %125 = tpu.reciprocal %124 {approx = true} : vector<8x1xf32> -> vector<8x1xf32>
    %126 = vector.broadcast %125 : vector<8x1xf32> to vector<8x16xf32>
    %127 = arith.mulf %122, %126 : vector<8x16xf32>
    %128 = arith.truncf %127 : vector<8x16xf32> to vector<8x16xbf16>
    %129 = vector.extract_strided_slice %55 {offsets = [0, 96], sizes = [16, 32], strides = [1, 1]} : vector<16x128xf32> to vector<16x32xf32>
    %130 = arith.truncf %129 : vector<16x32xf32> to vector<16x32xbf16>
    %cst_43 = arith.constant dense<0.000000e+00> : vector<8x32xf32>
    %131 = tpu.matmul %128, %130, %cst_43 {dimension_numbers = #tpu.dot_dimension_numbers<[1], [0], [0], [1], [0, 0, 1, 1], [], []>} : vector<8x16xbf16>, vector<16x32xbf16>, vector<8x32xf32> -> vector<8x32xf32>
    %132 = tpu.concatenate %74, %93, %112, %131 in 1 : vector<8x32xf32>, vector<8x32xf32>, vector<8x32xf32>, vector<8x32xf32> -> vector<8x128xf32>
    %c0_44 = arith.constant 0 : index
    %c0_45 = arith.constant 0 : index
    %133 = vector.load %arg10[%c0_44, %c0_45] : memref<1x128xf32, #tpu.memory_space<vmem>>, vector<1x128xf32>
    %134 = vector.broadcast %133 : vector<1x128xf32> to vector<8x128xf32>
    %135 = arith.addf %1, %134 : vector<8x128xf32>
    %136 = arith.truncf %132 : vector<8x128xf32> to vector<8x128xbf16>
    %c0_46 = arith.constant 0 : index
    %c0_47 = arith.constant 0 : index
    %137 = vector.load %arg9[%c0_46, %c0_47] : memref<128x128xbf16, #tpu.memory_space<vmem>>, vector<128x128xbf16>
    %cst_48 = arith.constant dense<0.000000e+00> : vector<8x128xf32>
    %138 = tpu.matmul %136, %137, %cst_48 {dimension_numbers = #tpu.dot_dimension_numbers<[1], [0], [0], [1], [0, 0, 1, 1], [], []>} : vector<8x128xbf16>, vector<128x128xbf16>, vector<8x128xf32> -> vector<8x128xf32>
    %139 = arith.addf %135, %138 : vector<8x128xf32>
    %c0_49 = arith.constant 0 : index
    %c0_50 = arith.constant 0 : index
    %140 = vector.load %arg11[%c0_49, %c0_50] : memref<1x128xf32, #tpu.memory_space<vmem>>, vector<1x128xf32>
    %c0_51 = arith.constant 0 : index
    %c0_52 = arith.constant 0 : index
    %141 = vector.load %arg12[%c0_51, %c0_52] : memref<1x128xf32, #tpu.memory_space<vmem>>, vector<1x128xf32>
    %cst_53 = arith.constant dense<0.000000e+00> : vector<8xf32>
    %142 = vector.multi_reduction <add>, %139, %cst_53 [1] : vector<8x128xf32> to vector<8xf32>
    %143 = vector.shape_cast %142 : vector<8xf32> to vector<8x1xf32>
    %cst_54 = arith.constant 1.280000e+02 : f32
    %144 = vector.broadcast %cst_54 : f32 to vector<8x1xf32>
    %145 = arith.divf %143, %144 : vector<8x1xf32>
    %146 = vector.broadcast %145 : vector<8x1xf32> to vector<8x128xf32>
    %147 = arith.subf %139, %146 : vector<8x128xf32>
    %148 = arith.mulf %147, %147 : vector<8x128xf32>
    %cst_55 = arith.constant dense<0.000000e+00> : vector<8xf32>
    %149 = vector.multi_reduction <add>, %148, %cst_55 [1] : vector<8x128xf32> to vector<8xf32>
    %150 = vector.shape_cast %149 : vector<8xf32> to vector<8x1xf32>
    %cst_56 = arith.constant 1.280000e+02 : f32
    %151 = vector.broadcast %cst_56 : f32 to vector<8x1xf32>
    %152 = arith.divf %150, %151 : vector<8x1xf32>
    %cst_57 = arith.constant 9.99999974E-6 : f32
    %153 = vector.broadcast %cst_57 : f32 to vector<8x1xf32>
    %154 = arith.addf %152, %153 : vector<8x1xf32>
    %155 = math.rsqrt %154 : vector<8x1xf32>
    %156 = vector.broadcast %155 : vector<8x1xf32> to vector<8x128xf32>
    %157 = arith.mulf %147, %156 : vector<8x128xf32>
    %158 = vector.broadcast %140 : vector<1x128xf32> to vector<8x128xf32>
    %159 = arith.mulf %157, %158 : vector<8x128xf32>
    %160 = vector.broadcast %141 : vector<1x128xf32> to vector<8x128xf32>
    %161 = arith.addf %159, %160 : vector<8x128xf32>
    %162 = arith.truncf %161 : vector<8x128xf32> to vector<8x128xbf16>
    %c0_58 = arith.constant 0 : index
    %c0_59 = arith.constant 0 : index
    %163 = vector.load %arg13[%c0_58, %c0_59] : memref<128x512xbf16, #tpu.memory_space<vmem>>, vector<128x512xbf16>
    %cst_60 = arith.constant dense<0.000000e+00> : vector<8x512xf32>
    %164 = tpu.matmul %162, %163, %cst_60 {dimension_numbers = #tpu.dot_dimension_numbers<[1], [0], [0], [1], [0, 0, 1, 1], [], []>} : vector<8x128xbf16>, vector<128x512xbf16>, vector<8x512xf32> -> vector<8x512xf32>
    %c0_61 = arith.constant 0 : index
    %c0_62 = arith.constant 0 : index
    %165 = vector.load %arg14[%c0_61, %c0_62] : memref<1x512xf32, #tpu.memory_space<vmem>>, vector<1x512xf32>
    %166 = vector.broadcast %165 : vector<1x512xf32> to vector<8x512xf32>
    %167 = arith.addf %164, %166 : vector<8x512xf32>
    %cst_63 = arith.constant 5.000000e-01 : f32
    %168 = vector.broadcast %cst_63 : f32 to vector<8x512xf32>
    %169 = arith.mulf %168, %167 : vector<8x512xf32>
    %cst_64 = arith.constant 4.471500e-02 : f32
    %170 = vector.broadcast %cst_64 : f32 to vector<8x512xf32>
    %171 = arith.mulf %170, %167 : vector<8x512xf32>
    %172 = arith.mulf %171, %167 : vector<8x512xf32>
    %173 = arith.mulf %172, %167 : vector<8x512xf32>
    %174 = arith.addf %167, %173 : vector<8x512xf32>
    %cst_65 = arith.constant 0.797884583 : f32
    %175 = vector.broadcast %cst_65 : f32 to vector<8x512xf32>
    %176 = arith.mulf %175, %174 : vector<8x512xf32>
    %177 = math.tanh %176 : vector<8x512xf32>
    %cst_66 = arith.constant 1.000000e+00 : f32
    %178 = vector.broadcast %cst_66 : f32 to vector<8x512xf32>
    %179 = arith.addf %178, %177 : vector<8x512xf32>
    %180 = arith.mulf %169, %179 : vector<8x512xf32>
    %181 = arith.truncf %180 : vector<8x512xf32> to vector<8x512xbf16>
    %c0_67 = arith.constant 0 : index
    %c0_68 = arith.constant 0 : index
    %182 = vector.load %arg15[%c0_67, %c0_68] : memref<512x128xbf16, #tpu.memory_space<vmem>>, vector<512x128xbf16>
    %cst_69 = arith.constant dense<0.000000e+00> : vector<8x128xf32>
    %183 = tpu.matmul %181, %182, %cst_69 {dimension_numbers = #tpu.dot_dimension_numbers<[1], [0], [0], [1], [0, 0, 1, 1], [], []>} : vector<8x512xbf16>, vector<512x128xbf16>, vector<8x128xf32> -> vector<8x128xf32>
    %c0_70 = arith.constant 0 : index
    %c0_71 = arith.constant 0 : index
    %184 = vector.load %arg16[%c0_70, %c0_71] : memref<1x128xf32, #tpu.memory_space<vmem>>, vector<1x128xf32>
    %185 = vector.broadcast %184 : vector<1x128xf32> to vector<8x128xf32>
    %186 = arith.addf %183, %185 : vector<8x128xf32>
    %187 = arith.addf %139, %186 : vector<8x128xf32>
    %188 = vector.shape_cast %187 : vector<8x128xf32> to vector<1x8x128xf32>
    %c0_72 = arith.constant 0 : index
    %c0_73 = arith.constant 0 : index
    %c0_74 = arith.constant 0 : index
    %189 = vector.load %arg17[%c0_72, %c0_73, %c0_74] : memref<1x8x128xf32, #tpu.memory_space<vmem>>, vector<1x8x128xf32>
    tpu.vector_store %arg17[%c0_72, %c0_73, %c0_74], %188 {strides = array<i32>} : memref<1x8x128xf32, #tpu.memory_space<vmem>>, vector<1x8x128xf32>,
    return
  }
  func.func @transform_0(%arg0: i32) -> (i32, i32, i32) {
    %c0_i32 = arith.constant 0 : i32
    %c0_i32_0 = arith.constant 0 : i32
    %c0_i32_1 = arith.constant 0 : i32
    return %arg0, %c0_i32, %c0_i32_0 : i32, i32, i32
  }
  func.func @transform_1(%arg0: i32) -> (i32, i32, i32) {
    %c0_i32 = arith.constant 0 : i32
    %c0_i32_0 = arith.constant 0 : i32
    %c0_i32_1 = arith.constant 0 : i32
    return %arg0, %c0_i32, %c0_i32_0 : i32, i32, i32
  }
  func.func @transform_2(%arg0: i32) -> (i32, i32) {
    %c0_i32 = arith.constant 0 : i32
    %c0_i32_0 = arith.constant 0 : i32
    %c0_i32_1 = arith.constant 0 : i32
    return %c0_i32, %c0_i32_0 : i32, i32
  }
  func.func @transform_3(%arg0: i32) -> (i32, i32) {
    %c0_i32 = arith.constant 0 : i32
    %c0_i32_0 = arith.constant 0 : i32
    %c0_i32_1 = arith.constant 0 : i32
    return %c0_i32, %c0_i32_0 : i32, i32
  }
  func.func @transform_4(%arg0: i32) -> (i32, i32) {
    %c0_i32 = arith.constant 0 : i32
    %c0_i32_0 = arith.constant 0 : i32
    %c0_i32_1 = arith.constant 0 : i32
    return %c0_i32, %c0_i32_0 : i32, i32
  }
  func.func @transform_5(%arg0: i32) -> (i32, i32) {
    %c0_i32 = arith.constant 0 : i32
    %c0_i32_0 = arith.constant 0 : i32
    %c0_i32_1 = arith.constant 0 : i32
    return %c0_i32, %c0_i32_0 : i32, i32
  }
  func.func @transform_6(%arg0: i32) -> (i32, i32) {
    %c0_i32 = arith.constant 0 : i32
    %c0_i32_0 = arith.constant 0 : i32
    %c0_i32_1 = arith.constant 0 : i32
    return %c0_i32, %c0_i32_0 : i32, i32
  }
  func.func @transform_7(%arg0: i32) -> (i32, i32) {
    %c0_i32 = arith.constant 0 : i32
    %c0_i32_0 = arith.constant 0 : i32
    %c0_i32_1 = arith.constant 0 : i32
    return %c0_i32, %c0_i32_0 : i32, i32
  }
  func.func @transform_8(%arg0: i32) -> (i32, i32) {
    %c0_i32 = arith.constant 0 : i32
    %c0_i32_0 = arith.constant 0 : i32
    %c0_i32_1 = arith.constant 0 : i32
    return %c0_i32, %c0_i32_0 : i32, i32
  }
  func.func @transform_9(%arg0: i32) -> (i32, i32) {
    %c0_i32 = arith.constant 0 : i32
    %c0_i32_0 = arith.constant 0 : i32
    %c0_i32_1 = arith.constant 0 : i32
    return %c0_i32, %c0_i32_0 : i32, i32
  }
  func.func @transform_10(%arg0: i32) -> (i32, i32) {
    %c0_i32 = arith.constant 0 : i32
    %c0_i32_0 = arith.constant 0 : i32
    %c0_i32_1 = arith.constant 0 : i32
    return %c0_i32, %c0_i32_0 : i32, i32
  }
  func.func @transform_11(%arg0: i32) -> (i32, i32) {
    %c0_i32 = arith.constant 0 : i32
    %c0_i32_0 = arith.constant 0 : i32
    %c0_i32_1 = arith.constant 0 : i32
    return %c0_i32, %c0_i32_0 : i32, i32
  }
  func.func @transform_12(%arg0: i32) -> (i32, i32) {
    %c0_i32 = arith.constant 0 : i32
    %c0_i32_0 = arith.constant 0 : i32
    %c0_i32_1 = arith.constant 0 : i32
    return %c0_i32, %c0_i32_0 : i32, i32
  }
  func.func @transform_13(%arg0: i32) -> (i32, i32) {
    %c0_i32 = arith.constant 0 : i32
    %c0_i32_0 = arith.constant 0 : i32
    %c0_i32_1 = arith.constant 0 : i32
    return %c0_i32, %c0_i32_0 : i32, i32
  }
  func.func @transform_14(%arg0: i32) -> (i32, i32) {
    %c0_i32 = arith.constant 0 : i32
    %c0_i32_0 = arith.constant 0 : i32
    %c0_i32_1 = arith.constant 0 : i32
    return %c0_i32, %c0_i32_0 : i32, i32
  }
  func.func @transform_15(%arg0: i32) -> (i32, i32) {
    %c0_i32 = arith.constant 0 : i32
    %c0_i32_0 = arith.constant 0 : i32
    %c0_i32_1 = arith.constant 0 : i32
    return %c0_i32, %c0_i32_0 : i32, i32
  }
  func.func @transform_16(%arg0: i32) -> (i32, i32, i32) {
    %c0_i32 = arith.constant 0 : i32
    %c0_i32_0 = arith.constant 0 : i32
    %c0_i32_1 = arith.constant 0 : i32
    return %arg0, %c0_i32, %c0_i32_0 : i32, i32, i32
  }
}

</mosaic_0001>

<llo_original>
// kernel: tpu_custom_call.1
$region0: #{tpu_custom_call.1}
  #allocation0 [shape = 'u32[]', space=smem, size = 0x4, offset = 0x4, fixed_abs, tag = 'smem constant byte address 0x4 - core index']
  #allocation1 [shape = 'u32[144,128]{1,0:T(1,128)}', space=vmem, size = 0x12000, scoped, tag = 'internal scratch']
  %s0 = inlined_call_operand.hbm [shape: f32[2,8,128], index: 0, kind: input, shape index: {}]
  %s1 = inlined_call_operand.hbm [shape: f32[2,16,128], index: 1, kind: input, shape index: {}]
  %s2 = inlined_call_operand.vmem [shape: f32[1,128], index: 2, kind: input, shape index: {}]
  %s3 = inlined_call_operand.vmem [shape: f32[1,128], index: 3, kind: input, shape index: {}]
  %s4 = inlined_call_operand.vmem [shape: f32[1,128], index: 4, kind: input, shape index: {}]
  %s5 = inlined_call_operand.vmem [shape: f32[1,128], index: 5, kind: input, shape index: {}]
  %s6 = inlined_call_operand.hbm [shape: bf16[128,128], index: 6, kind: input, shape index: {}]
  %s7 = inlined_call_operand.hbm [shape: bf16[128,256], index: 7, kind: input, shape index: {}]
  %s8 = inlined_call_operand.hbm [shape: bf16[128,128], index: 8, kind: input, shape index: {}]
  %s9 = inlined_call_operand.vmem [shape: f32[1,128], index: 9, kind: input, shape index: {}]
  %s10 = inlined_call_operand.vmem [shape: f32[1,128], index: 10, kind: input, shape index: {}]
  %s11 = inlined_call_operand.vmem [shape: f32[1,128], index: 11, kind: input, shape index: {}]
  %s12 = inlined_call_operand.hbm [shape: bf16[128,512], index: 12, kind: input, shape index: {}]
  %s13 = inlined_call_operand.vmem [shape: f32[1,512], index: 13, kind: input, shape index: {}]
  %s14 = inlined_call_operand.hbm [shape: bf16[512,128], index: 14, kind: input, shape index: {}]
  %s15 = inlined_call_operand.vmem [shape: f32[1,128], index: 15, kind: input, shape index: {}]
  %s16 = inlined_call_operand.hbm [shape: f32[2,8,128], index: 16, kind: output, shape index: {}]
  %s17 = sld [smem:[#allocation0]]
  $region125: #{tpu_custom_call.1} parent=0
    _
  %s19 = ssub.s32 1, %s17
  %s20 = scalar_select 0, %s19, %s17
  $region1: #{tpu_custom_call.1} parent=0
    #allocation2 [shape = 'u8[8192]{0}', space=vmem, size = 0x2000, scoped, tag = 'input window, operand 0']
    #allocation3 [shape = 's32[2]{0}', space=sflag, size = 0x8, scoped, tag = 'scoped memory for tpu_custom_call.1']
    #allocation4 [shape = 's32[2]{0}', space=sflag, size = 0x8, scoped, tag = 'scoped memory for tpu_custom_call.1']
    #allocation5 [shape = 'u8[16384]{0}', space=vmem, size = 0x4000, scoped, tag = 'input window, operand 1']
    #allocation6 [shape = 's32[2]{0}', space=sflag, size = 0x8, scoped, tag = 'scoped memory for tpu_custom_call.1']
    #allocation7 [shape = 'u8[32768]{0}', space=vmem, size = 0x8000, scoped, tag = 'input window, operand 6, single buffered']
    #allocation8 [shape = 'u8[65536]{0}', space=vmem, size = 0x10000, scoped, tag = 'input window, operand 7, single buffered']
    #allocation9 [shape = 's32[1]{0}', space=sflag, size = 0x4, scoped, tag = 'scoped memory for tpu_custom_call.1']
    #allocation10 [shape = 'u8[32768]{0}', space=vmem, size = 0x8000, scoped, tag = 'input window, operand 8, single buffered']
    #allocation11 [shape = 'u8[131072]{0}', space=vmem, size = 0x20000, scoped, tag = 'input window, operand 12, single buffered']
    #allocation12 [shape = 's32[1]{0}', space=sflag, size = 0x4, scoped, tag = 'scoped memory for tpu_custom_call.1']
    #allocation13 [shape = 'u8[131072]{0}', space=vmem, size = 0x20000, scoped, tag = 'input window, operand 14, single buffered']
    #allocation14 [shape = 'u8[8192]{0}', space=vmem, size = 0x2000, scoped, tag = 'output window, operand 0']
    %21 = vsyncpa [#allocation3], 0
    %s22 = scalar_lea.sflag [#allocation3], 1
    %23 = vsyncpa %s22, 0
    %24 = vsyncpa [#allocation6], 0
    %s25 = scalar_lea.sflag [#allocation6], 1
    %26 = vsyncpa %s25, 0
    %27 = vsyncpa [#allocation9], 0
    %28 = vsyncpa [#allocation12], 0
    %29 = vsyncpa [#allocation4], 0
    %s30 = scalar_lea.sflag [#allocation4], 1
    %31 = vsyncpa %s30, 0
    loop: start=0, step=1, limit=4
    $region2: #{tpu_custom_call.1} parent=1 // loop_pre_header
      _
    $region3: #{tpu_custom_call.1} parent=1 // loop_header
      %s33 = sphi 0, %s37
      %p34 = scmp.ge.s32.totalorder %s33, 4
      %s43 = sphi 0, %s45
      %s46 = sphi 0, %s43
      %s47 = sphi 0, %s46
      %s63 = sphi 0, %s47
      %s69 = sphi 0, %s71
      %s72 = sphi 0, %s69
      %s73 = sphi 0, %s72
      %s89 = sphi 0, %s73
      %s93 = sphi 0, %s93
      %s95 = sphi 0, %s93
      %s96 = sphi 0, %s95
      %s110 = sphi 0, %s96
      %s114 = sphi 0, %s114
      %s116 = sphi 0, %s114
      %s117 = sphi 0, %s116
      %s131 = sphi 0, %s117
      %s135 = sphi 0, %s135
      %s137 = sphi 0, %s135
      %s138 = sphi 0, %s137
      %s152 = sphi 0, %s138
      %s156 = sphi 0, %s156
      %s158 = sphi 0, %s156
      %s159 = sphi 0, %s158
      %s173 = sphi 0, %s159
      %s177 = sphi 0, %s177
      %s179 = sphi 0, %s177
      %s180 = sphi 0, %s179
      %s194 = sphi 0, %s180
      %s198 = sphi 0, %s198
      %s200 = sphi 0, %s198
      %s201 = sphi 0, %s200
      %s215 = sphi 0, %s201
      %s219 = sphi 0, %s219
      %s221 = sphi 0, %s219
      %s222 = sphi 0, %s221
      %s236 = sphi 0, %s222
      %s240 = sphi 0, %s240
      %s242 = sphi 0, %s240
      %s243 = sphi 0, %s242
      %s257 = sphi 0, %s243
      %s261 = sphi 0, %s261
      %s263 = sphi 0, %s261
      %s264 = sphi 0, %s263
      %s278 = sphi 0, %s264
      %s282 = sphi 0, %s282
      %s284 = sphi 0, %s282
      %s285 = sphi 0, %s284
      %s299 = sphi 0, %s285
      %s303 = sphi 0, %s303
      %s305 = sphi 0, %s303
      %s306 = sphi 0, %s305
      %s320 = sphi 0, %s306
      %s324 = sphi 0, %s324
      %s326 = sphi 0, %s324
      %s327 = sphi 0, %s326
      %s341 = sphi 0, %s327
      %s345 = sphi 0, %s345
      %s347 = sphi 0, %s345
      %s348 = sphi 0, %s347
      %s362 = sphi 0, %s348
      %s366 = sphi 0, %s366
      %s368 = sphi 0, %s366
      %s369 = sphi 0, %s368
      %s383 = sphi 0, %s369
      %s389 = sphi 0, %s391
      %s392 = sphi 0, %s389
      %s393 = sphi 0, %s392
      %s409 = sphi 0, %s393
    $region4: #{tpu_custom_call.1} parent=1 // loop_header_branch
      %36 = sbr.rel (%p34) target = $region8
    $region5: #{tpu_custom_call.1} parent=1 // loop_body
      %s38 = ssub.s32 %s33, 1
      %s39 = ssub.s32 %s33, 2
      %s40 = sadd.s32 %s33, 1
      %s41 = ssub.s32 %s33, %s40
      %p42 = scmp.eq.s32.totalorder %s41, 0
      %s44 = sadd.s32 %s43, 1
      %s45 = scalar_select %p42, %s43, %s44
      %p48 = pneg %p42
      %p49 = scmp.eq.s32.totalorder %s33, 1
      %p50 = por %p48, %p49
      %p51 = scmp.ne.s32.totalorder %s43, %s46
      %p52 = scmp.eq.s32.totalorder %s33, 0
      %p53 = por %p51, %p52
      %p54 = scmp.ne.s32.totalorder %s43, %s46
      %p55 = scmp.eq.s32.totalorder %s38, 1
      %p56 = por %p54, %p55
      %p57 = scmp.ne.s32.totalorder %s46, %s47
      %p58 = scmp.eq.s32.totalorder %s38, 0
      %p59 = por %p57, %p58
      %p60 = scmp.ne.s32.totalorder %s46, %s47
      %p61 = scmp.eq.s32.totalorder %s39, 1
      %p62 = por %p60, %p61
      %p64 = scmp.ne.s32.totalorder %s47, %s63
      %p65 = scmp.eq.s32.totalorder %s39, 0
      %p66 = por %p64, %p65
      %s67 = ssub.s32 %s33, %s40
      %p68 = scmp.eq.s32.totalorder %s67, 0
      %s70 = sadd.s32 %s69, 1
      %s71 = scalar_select %p68, %s69, %s70
      %p74 = pneg %p68
      %p75 = scmp.eq.s32.totalorder %s33, 1
      %p76 = por %p74, %p75
      %p77 = scmp.ne.s32.totalorder %s69, %s72
      %p78 = scmp.eq.s32.totalorder %s33, 0
      %p79 = por %p77, %p78
      %p80 = scmp.ne.s32.totalorder %s69, %s72
      %p81 = scmp.eq.s32.totalorder %s38, 1
      %p82 = por %p80, %p81
      %p83 = scmp.ne.s32.totalorder %s72, %s73
      %p84 = scmp.eq.s32.totalorder %s38, 0
      %p85 = por %p83, %p84
      %p86 = scmp.ne.s32.totalorder %s72, %s73
      %p87 = scmp.eq.s32.totalorder %s39, 1
      %p88 = por %p86, %p87
      %p90 = scmp.ne.s32.totalorder %s73, %s89
      %p91 = scmp.eq.s32.totalorder %s39, 0
      %p92 = por %p90, %p91
      %s94 = sadd.s32 %s93, 1
      %p97 = scmp.eq.s32.totalorder %s33, 1
      %p98 = scmp.ne.s32.totalorder %s93, %s95
      %p99 = scmp.eq.s32.totalorder %s33, 0
      %p100 = por %p98, %p99
      %p101 = scmp.ne.s32.totalorder %s93, %s95
      %p102 = scmp.eq.s32.totalorder %s38, 1
      %p103 = por %p101, %p102
      %p104 = scmp.ne.s32.totalorder %s95, %s96
      %p105 = scmp.eq.s32.totalorder %s38, 0
      %p106 = por %p104, %p105
      %p107 = scmp.ne.s32.totalorder %s95, %s96
      %p108 = scmp.eq.s32.totalorder %s39, 1
      %p109 = por %p107, %p108
      %p111 = scmp.ne.s32.totalorder %s96, %s110
      %p112 = scmp.eq.s32.totalorder %s39, 0
      %p113 = por %p111, %p112
      %s115 = sadd.s32 %s114, 1
      %p118 = scmp.eq.s32.totalorder %s33, 1
      %p119 = scmp.ne.s32.totalorder %s114, %s116
      %p120 = scmp.eq.s32.totalorder %s33, 0
      %p121 = por %p119, %p120
      %p122 = scmp.ne.s32.totalorder %s114, %s116
      %p123 = scmp.eq.s32.totalorder %s38, 1
      %p124 = por %p122, %p123
      %p125 = scmp.ne.s32.totalorder %s116, %s117
      %p126 = scmp.eq.s32.totalorder %s38, 0
      %p127 = por %p125, %p126
      %p128 = scmp.ne.s32.totalorder %s116, %s117
      %p129 = scmp.eq.s32.totalorder %s39, 1
      %p130 = por %p128, %p129
      %p132 = scmp.ne.s32.totalorder %s117, %s131
      %p133 = scmp.eq.s32.totalorder %s39, 0
      %p134 = por %p132, %p133
      %s136 = sadd.s32 %s135, 1
      %p139 = scmp.eq.s32.totalorder %s33, 1
      %p140 = scmp.ne.s32.totalorder %s135, %s137
      %p141 = scmp.eq.s32.totalorder %s33, 0
      %p142 = por %p140, %p141
      %p143 = scmp.ne.s32.totalorder %s135, %s137
      %p144 = scmp.eq.s32.totalorder %s38, 1
      %p145 = por %p143, %p144
      %p146 = scmp.ne.s32.totalorder %s137, %s138
      %p147 = scmp.eq.s32.totalorder %s38, 0
      %p148 = por %p146, %p147
      %p149 = scmp.ne.s32.totalorder %s137, %s138
      %p150 = scmp.eq.s32.totalorder %s39, 1
      %p151 = por %p149, %p150
      %p153 = scmp.ne.s32.totalorder %s138, %s152
      %p154 = scmp.eq.s32.totalorder %s39, 0
      %p155 = por %p153, %p154
      %s157 = sadd.s32 %s156, 1
      %p160 = scmp.eq.s32.totalorder %s33, 1
      %p161 = scmp.ne.s32.totalorder %s156, %s158
      %p162 = scmp.eq.s32.totalorder %s33, 0
      %p163 = por %p161, %p162
      %p164 = scmp.ne.s32.totalorder %s156, %s158
      %p165 = scmp.eq.s32.totalorder %s38, 1
      %p166 = por %p164, %p165
      %p167 = scmp.ne.s32.totalorder %s158, %s159
      %p168 = scmp.eq.s32.totalorder %s38, 0
      %p169 = por %p167, %p168
      %p170 = scmp.ne.s32.totalorder %s158, %s159
      %p171 = scmp.eq.s32.totalorder %s39, 1
      %p172 = por %p170, %p171
      %p174 = scmp.ne.s32.totalorder %s159, %s173
      %p175 = scmp.eq.s32.totalorder %s39, 0
      %p176 = por %p174, %p175
      %s178 = sadd.s32 %s177, 1
      %p181 = scmp.eq.s32.totalorder %s33, 1
      %p182 = scmp.ne.s32.totalorder %s177, %s179
      %p183 = scmp.eq.s32.totalorder %s33, 0
      %p184 = por %p182, %p183
      %p185 = scmp.ne.s32.totalorder %s177, %s179
      %p186 = scmp.eq.s32.totalorder %s38, 1
      %p187 = por %p185, %p186
      %p188 = scmp.ne.s32.totalorder %s179, %s180
      %p189 = scmp.eq.s32.totalorder %s38, 0
      %p190 = por %p188, %p189
      %p191 = scmp.ne.s32.totalorder %s179, %s180
      %p192 = scmp.eq.s32.totalorder %s39, 1
      %p193 = por %p191, %p192
      %p195 = scmp.ne.s32.totalorder %s180, %s194
      %p196 = scmp.eq.s32.totalorder %s39, 0
      %p197 = por %p195, %p196
      %s199 = sadd.s32 %s198, 1
      %p202 = scmp.eq.s32.totalorder %s33, 1
      %p203 = scmp.ne.s32.totalorder %s198, %s200
      %p204 = scmp.eq.s32.totalorder %s33, 0
      %p205 = por %p203, %p204
      %p206 = scmp.ne.s32.totalorder %s198, %s200
      %p207 = scmp.eq.s32.totalorder %s38, 1
      %p208 = por %p206, %p207
      %p209 = scmp.ne.s32.totalorder %s200, %s201
      %p210 = scmp.eq.s32.totalorder %s38, 0
      %p211 = por %p209, %p210
      %p212 = scmp.ne.s32.totalorder %s200, %s201
      %p213 = scmp.eq.s32.totalorder %s39, 1
      %p214 = por %p212, %p213
      %p216 = scmp.ne.s32.totalorder %s201, %s215
      %p217 = scmp.eq.s32.totalorder %s39, 0
      %p218 = por %p216, %p217
      %s220 = sadd.s32 %s219, 1
      %p223 = scmp.eq.s32.totalorder %s33, 1
      %p224 = scmp.ne.s32.totalorder %s219, %s221
      %p225 = scmp.eq.s32.totalorder %s33, 0
      %p226 = por %p224, %p225
      %p227 = scmp.ne.s32.totalorder %s219, %s221
      %p228 = scmp.eq.s32.totalorder %s38, 1
      %p229 = por %p227, %p228
      %p230 = scmp.ne.s32.totalorder %s221, %s222
      %p231 = scmp.eq.s32.totalorder %s38, 0
      %p232 = por %p230, %p231
      %p233 = scmp.ne.s32.totalorder %s221, %s222
      %p234 = scmp.eq.s32.totalorder %s39, 1
      %p235 = por %p233, %p234
      %p237 = scmp.ne.s32.totalorder %s222, %s236
      %p238 = scmp.eq.s32.totalorder %s39, 0
      %p239 = por %p237, %p238
      %s241 = sadd.s32 %s240, 1
      %p244 = scmp.eq.s32.totalorder %s33, 1
      %p245 = scmp.ne.s32.totalorder %s240, %s242
      %p246 = scmp.eq.s32.totalorder %s33, 0
      %p247 = por %p245, %p246
      %p248 = scmp.ne.s32.totalorder %s240, %s242
      %p249 = scmp.eq.s32.totalorder %s38, 1
      %p250 = por %p248, %p249
      %p251 = scmp.ne.s32.totalorder %s242, %s243
      %p252 = scmp.eq.s32.totalorder %s38, 0
      %p253 = por %p251, %p252
      %p254 = scmp.ne.s32.totalorder %s242, %s243
      %p255 = scmp.eq.s32.totalorder %s39, 1
      %p256 = por %p254, %p255
      %p258 = scmp.ne.s32.totalorder %s243, %s257
      %p259 = scmp.eq.s32.totalorder %s39, 0
      %p260 = por %p258, %p259
      %s262 = sadd.s32 %s261, 1
      %p265 = scmp.eq.s32.totalorder %s33, 1
      %p266 = scmp.ne.s32.totalorder %s261, %s263
      %p267 = scmp.eq.s32.totalorder %s33, 0
      %p268 = por %p266, %p267
      %p269 = scmp.ne.s32.totalorder %s261, %s263
      %p270 = scmp.eq.s32.totalorder %s38, 1
      %p271 = por %p269, %p270
      %p272 = scmp.ne.s32.totalorder %s263, %s264
      %p273 = scmp.eq.s32.totalorder %s38, 0
      %p274 = por %p272, %p273
      %p275 = scmp.ne.s32.totalorder %s263, %s264
      %p276 = scmp.eq.s32.totalorder %s39, 1
      %p277 = por %p275, %p276
      %p279 = scmp.ne.s32.totalorder %s264, %s278
      %p280 = scmp.eq.s32.totalorder %s39, 0
      %p281 = por %p279, %p280
      %s283 = sadd.s32 %s282, 1
      %p286 = scmp.eq.s32.totalorder %s33, 1
      %p287 = scmp.ne.s32.totalorder %s282, %s284
      %p288 = scmp.eq.s32.totalorder %s33, 0
      %p289 = por %p287, %p288
      %p290 = scmp.ne.s32.totalorder %s282, %s284
      %p291 = scmp.eq.s32.totalorder %s38, 1
      %p292 = por %p290, %p291
      %p293 = scmp.ne.s32.totalorder %s284, %s285
      %p294 = scmp.eq.s32.totalorder %s38, 0
      %p295 = por %p293, %p294
      %p296 = scmp.ne.s32.totalorder %s284, %s285
      %p297 = scmp.eq.s32.totalorder %s39, 1
      %p298 = por %p296, %p297
      %p300 = scmp.ne.s32.totalorder %s285, %s299
      %p301 = scmp.eq.s32.totalorder %s39, 0
      %p302 = por %p300, %p301
      %s304 = sadd.s32 %s303, 1
      %p307 = scmp.eq.s32.totalorder %s33, 1
      %p308 = scmp.ne.s32.totalorder %s303, %s305
      %p309 = scmp.eq.s32.totalorder %s33, 0
      %p310 = por %p308, %p309
      %p311 = scmp.ne.s32.totalorder %s303, %s305
      %p312 = scmp.eq.s32.totalorder %s38, 1
      %p313 = por %p311, %p312
      %p314 = scmp.ne.s32.totalorder %s305, %s306
      %p315 = scmp.eq.s32.totalorder %s38, 0
      %p316 = por %p314, %p315
      %p317 = scmp.ne.s32.totalorder %s305, %s306
      %p318 = scmp.eq.s32.totalorder %s39, 1
      %p319 = por %p317, %p318
      %p321 = scmp.ne.s32.totalorder %s306, %s320
      %p322 = scmp.eq.s32.totalorder %s39, 0
      %p323 = por %p321, %p322
      %s325 = sadd.s32 %s324, 1
      %p328 = scmp.eq.s32.totalorder %s33, 1
      %p329 = scmp.ne.s32.totalorder %s324, %s326
      %p330 = scmp.eq.s32.totalorder %s33, 0
      %p331 = por %p329, %p330
      %p332 = scmp.ne.s32.totalorder %s324, %s326
      %p333 = scmp.eq.s32.totalorder %s38, 1
      %p334 = por %p332, %p333
      %p335 = scmp.ne.s32.totalorder %s326, %s327
      %p336 = scmp.eq.s32.totalorder %s38, 0
      %p337 = por %p335, %p336
      %p338 = scmp.ne.s32.totalorder %s326, %s327
      %p339 = scmp.eq.s32.totalorder %s39, 1
      %p340 = por %p338, %p339
      %p342 = scmp.ne.s32.totalorder %s327, %s341
      %p343 = scmp.eq.s32.totalorder %s39, 0
      %p344 = por %p342, %p343
      %s346 = sadd.s32 %s345, 1
      %p349 = scmp.eq.s32.totalorder %s33, 1
      %p350 = scmp.ne.s32.totalorder %s345, %s347
      %p351 = scmp.eq.s32.totalorder %s33, 0
      %p352 = por %p350, %p351
      %p353 = scmp.ne.s32.totalorder %s345, %s347
      %p354 = scmp.eq.s32.totalorder %s38, 1
      %p355 = por %p353, %p354
      %p356 = scmp.ne.s32.totalorder %s347, %s348
      %p357 = scmp.eq.s32.totalorder %s38, 0
      %p358 = por %p356, %p357
      %p359 = scmp.ne.s32.totalorder %s347, %s348
      %p360 = scmp.eq.s32.totalorder %s39, 1
      %p361 = por %p359, %p360
      %p363 = scmp.ne.s32.totalorder %s348, %s362
      %p364 = scmp.eq.s32.totalorder %s39, 0
      %p365 = por %p363, %p364
      %s367 = sadd.s32 %s366, 1
      %p370 = scmp.eq.s32.totalorder %s33, 1
      %p371 = scmp.ne.s32.totalorder %s366, %s368
      %p372 = scmp.eq.s32.totalorder %s33, 0
      %p373 = por %p371, %p372
      %p374 = scmp.ne.s32.totalorder %s366, %s368
      %p375 = scmp.eq.s32.totalorder %s38, 1
      %p376 = por %p374, %p375
      %p377 = scmp.ne.s32.totalorder %s368, %s369
      %p378 = scmp.eq.s32.totalorder %s38, 0
      %p379 = por %p377, %p378
      %p380 = scmp.ne.s32.totalorder %s368, %s369
      %p381 = scmp.eq.s32.totalorder %s39, 1
      %p382 = por %p380, %p381
      %p384 = scmp.ne.s32.totalorder %s369, %s383
      %p385 = scmp.eq.s32.totalorder %s39, 0
      %p386 = por %p384, %p385
      %s387 = ssub.s32 %s33, %s40
      %p388 = scmp.eq.s32.totalorder %s387, 0
      %s390 = sadd.s32 %s389, 1
      %s391 = scalar_select %p388, %s389, %s390
      %p394 = pneg %p388
      %p395 = scmp.eq.s32.totalorder %s33, 1
      %p396 = por %p394, %p395
      %p397 = scmp.ne.s32.totalorder %s389, %s392
      %p398 = scmp.eq.s32.totalorder %s33, 0
      %p399 = por %p397, %p398
      %p400 = scmp.ne.s32.totalorder %s389, %s392
      %p401 = scmp.eq.s32.totalorder %s38, 1
      %p402 = por %p400, %p401
      %p403 = scmp.ne.s32.totalorder %s392, %s393
      %p404 = scmp.eq.s32.totalorder %s38, 0
      %p405 = por %p403, %p404
      %p406 = scmp.ne.s32.totalorder %s392, %s393
      %p407 = scmp.eq.s32.totalorder %s39, 1
      %p408 = por %p406, %p407
      %p410 = scmp.ne.s32.totalorder %s393, %s409
      %p411 = scmp.eq.s32.totalorder %s39, 0
      %p412 = por %p410, %p411
      %p413 = scmp.le.s32.totalorder 1, %s33
      %p414 = scmp.lt.s32.totalorder %s33, 3
      %p415 = pnand %p413, %p414
      %p416 = pneg %p415
      // Predicated region
      $region9: #{tpu_custom_call.1} parent=5 // pred_check
        _
      $region10: #{tpu_custom_call.1} parent=5 // pred_check_branch
        %418 = sbr.rel (%p415) target = $region12
      $region11: #{tpu_custom_call.1} parent=5 // pred_region
        %s419 = ssub.s32 %s33, 1
        // Predicated region
        $region13: #{tpu_custom_call.1} parent=11 // pred_check
          %p420 = pneg %p106
        $region14: #{tpu_custom_call.1} parent=11 // pred_check_branch
          %422 = sbr.rel (%p420) target = $region16
        $region15: #{tpu_custom_call.1} parent=11 // pred_region
          _
        $region16: #{tpu_custom_call.1} parent=11 // pred_fallthru
          _
        // Predicated region
        $region17: #{tpu_custom_call.1} parent=11 // pred_check
          %p423 = pneg %p127
        $region18: #{tpu_custom_call.1} parent=11 // pred_check_branch
          %425 = sbr.rel (%p423) target = $region20
        $region19: #{tpu_custom_call.1} parent=11 // pred_region
          _
        $region20: #{tpu_custom_call.1} parent=11 // pred_fallthru
          _
        // Predicated region
        $region21: #{tpu_custom_call.1} parent=11 // pred_check
          %p426 = pneg %p148
        $region22: #{tpu_custom_call.1} parent=11 // pred_check_branch
          %428 = sbr.rel (%p426) target = $region24
        $region23: #{tpu_custom_call.1} parent=11 // pred_region
          _
        $region24: #{tpu_custom_call.1} parent=11 // pred_fallthru
          _
        // Predicated region
        $region25: #{tpu_custom_call.1} parent=11 // pred_check
          %p429 = pneg %p169
        $region26: #{tpu_custom_call.1} parent=11 // pred_check_branch
          %431 = sbr.rel (%p429) target = $region28
        $region27: #{tpu_custom_call.1} parent=11 // pred_region
          _
        $region28: #{tpu_custom_call.1} parent=11 // pred_fallthru
          _
        // Predicated region
        $region29: #{tpu_custom_call.1} parent=11 // pred_check
          %p432 = pneg %p190
        $region30: #{tpu_custom_call.1} parent=11 // pred_check_branch
          %434 = sbr.rel (%p432) target = $region32
        $region31: #{tpu_custom_call.1} parent=11 // pred_region
          %s436 = ssub.s32 1024, 1024
          %437 = vsyncadd [#allocation6], %s436
          %s438 = sshll.u32 [#allocation7], 4
          %s439 = int_to_ptr.vmem [resolvable:$true] %s438
          %444 = dma.hbm_to_vmem [thread:$0]  %s6, 1024, %s439, [#allocation6], 64, 64, 4
        $region32: #{tpu_custom_call.1} parent=11 // pred_fallthru
          _
        // Predicated region
        $region33: #{tpu_custom_call.1} parent=11 // pred_check
          %p445 = pneg %p211
        $region34: #{tpu_custom_call.1} parent=11 // pred_check_branch
          %447 = sbr.rel (%p445) target = $region36
        $region35: #{tpu_custom_call.1} parent=11 // pred_region
          %s449 = ssub.s32 2048, 2048
          %450 = vsyncadd [#allocation9], %s449
          %s451 = sshll.u32 [#allocation8], 4
          %s452 = int_to_ptr.vmem [resolvable:$true] %s451
          %457 = dma.hbm_to_vmem [thread:$0]  %s7, 2048, %s452, [#allocation9], 128, 128, 8
        $region36: #{tpu_custom_call.1} parent=11 // pred_fallthru
          _
        // Predicated region
        $region37: #{tpu_custom_call.1} parent=11 // pred_check
          %p458 = pneg %p232
        $region38: #{tpu_custom_call.1} parent=11 // pred_check_branch
          %460 = sbr.rel (%p458) target = $region40
        $region39: #{tpu_custom_call.1} parent=11 // pred_region
          %s462 = ssub.s32 1024, 1024
          %463 = vsyncadd [#allocation9], %s462
          %s464 = sshll.u32 [#allocation10], 4
          %s465 = int_to_ptr.vmem [resolvable:$true] %s464
          %470 = dma.hbm_to_vmem [thread:$0]  %s8, 1024, %s465, [#allocation9], 64, 64, 4
        $region40: #{tpu_custom_call.1} parent=11 // pred_fallthru
          _
        // Predicated region
        $region41: #{tpu_custom_call.1} parent=11 // pred_check
          %p471 = pneg %p253
        $region42: #{tpu_custom_call.1} parent=11 // pred_check_branch
          %473 = sbr.rel (%p471) target = $region44
        $region43: #{tpu_custom_call.1} parent=11 // pred_region
          _
        $region44: #{tpu_custom_call.1} parent=11 // pred_fallthru
          _
        // Predicated region
        $region45: #{tpu_custom_call.1} parent=11 // pred_check
          %p474 = pneg %p274
        $region46: #{tpu_custom_call.1} parent=11 // pred_check_branch
          %476 = sbr.rel (%p474) target = $region48
        $region47: #{tpu_custom_call.1} parent=11 // pred_region
          _
        $region48: #{tpu_custom_call.1} parent=11 // pred_fallthru
          _
        // Predicated region
        $region49: #{tpu_custom_call.1} parent=11 // pred_check
          %p477 = pneg %p295
        $region50: #{tpu_custom_call.1} parent=11 // pred_check_branch
          %479 = sbr.rel (%p477) target = $region52
        $region51: #{tpu_custom_call.1} parent=11 // pred_region
          _
        $region52: #{tpu_custom_call.1} parent=11 // pred_fallthru
          _
        // Predicated region
        $region53: #{tpu_custom_call.1} parent=11 // pred_check
          %p480 = pneg %p316
        $region54: #{tpu_custom_call.1} parent=11 // pred_check_branch
          %482 = sbr.rel (%p480) target = $region56
        $region55: #{tpu_custom_call.1} parent=11 // pred_region
          %s484 = ssub.s32 4096, 4096
          %485 = vsyncadd [#allocation12], %s484
          %s486 = sshll.u32 [#allocation11], 4
          %s487 = int_to_ptr.vmem [resolvable:$true] %s486
          %492 = dma.hbm_to_vmem [thread:$0]  %s12, 4096, %s487, [#allocation12], 256, 256, 16
        $region56: #{tpu_custom_call.1} parent=11 // pred_fallthru
          _
        // Predicated region
        $region57: #{tpu_custom_call.1} parent=11 // pred_check
          %p493 = pneg %p337
        $region58: #{tpu_custom_call.1} parent=11 // pred_check_branch
          %495 = sbr.rel (%p493) target = $region60
        $region59: #{tpu_custom_call.1} parent=11 // pred_region
          _
        $region60: #{tpu_custom_call.1} parent=11 // pred_fallthru
          _
        // Predicated region
        $region61: #{tpu_custom_call.1} parent=11 // pred_check
          %p496 = pneg %p358
        $region62: #{tpu_custom_call.1} parent=11 // pred_check_branch
          %498 = sbr.rel (%p496) target = $region64
        $region63: #{tpu_custom_call.1} parent=11 // pred_region
          %s500 = ssub.s32 4096, 4096
          %501 = vsyncadd [#allocation12], %s500
          %s502 = sshll.u32 [#allocation13], 4
          %s503 = int_to_ptr.vmem [resolvable:$true] %s502
          %508 = dma.hbm_to_vmem [thread:$0]  %s14, 4096, %s503, [#allocation12], 64, 64, 4
        $region64: #{tpu_custom_call.1} parent=11 // pred_fallthru
          _
        // Predicated region
        $region65: #{tpu_custom_call.1} parent=11 // pred_check
          %p509 = pneg %p379
        $region66: #{tpu_custom_call.1} parent=11 // pred_check_branch
          %511 = sbr.rel (%p509) target = $region68
        $region67: #{tpu_custom_call.1} parent=11 // pred_region
          _
        $region68: #{tpu_custom_call.1} parent=11 // pred_fallthru
          _
      $region12: #{tpu_custom_call.1} parent=5 // pred_fallthru
        _
      %p512 = scmp.lt.s32.totalorder %s33, 2
      // Predicated region
      $region69: #{tpu_custom_call.1} parent=5 // pred_check
        %p513 = pneg %p512
      $region70: #{tpu_custom_call.1} parent=5 // pred_check_branch
        %515 = sbr.rel (%p513) target = $region72
      $region71: #{tpu_custom_call.1} parent=5 // pred_region
        // Predicated region
        $region73: #{tpu_custom_call.1} parent=71 // pred_check
          %p516 = pneg %p53
        $region74: #{tpu_custom_call.1} parent=71 // pred_check_branch
          %518 = sbr.rel (%p516) target = $region76
        $region75: #{tpu_custom_call.1} parent=71 // pred_region
          %s519 = sand.u32 %s43, 1
          %s520 = scalar_lea.sflag [#allocation3], %s519
          %s521 = sand.u32 %s43, 1
          %s522 = smul.addr %s521, 8
          %s523 = scalar_lea.vmem [#allocation2], %s522
          %s525 = ssub.s32 128, 128
          %526 = vsyncadd %s520, %s525
          %s527 = smul.addr %s33, 128
          %s528 = scalar_lea.hbm %s0, %s527
          %s530 = sshll.u32 %s523, 4
          %s531 = int_to_ptr.vmem [resolvable:$true] %s530
          %533 = dma.hbm_to_vmem [thread:$0]  %s528, 128, %s531, %s520
        $region76: #{tpu_custom_call.1} parent=71 // pred_fallthru
          _
        // Predicated region
        $region77: #{tpu_custom_call.1} parent=71 // pred_check
          %p534 = pneg %p79
        $region78: #{tpu_custom_call.1} parent=71 // pred_check_branch
          %536 = sbr.rel (%p534) target = $region80
        $region79: #{tpu_custom_call.1} parent=71 // pred_region
          %s537 = sand.u32 %s33, 1
          %s538 = scalar_lea.sflag [#allocation6], %s537
          %s539 = sand.u32 %s69, 1
          %s540 = smul.addr %s539, 16
          %s541 = scalar_lea.vmem [#allocation5], %s540
          %s543 = ssub.s32 256, 256
          %544 = vsyncadd %s538, %s543
          %s545 = smul.addr %s33, 2
          %s546 = smul.addr %s545, 128
          %s547 = scalar_lea.hbm %s1, %s546
          %s548 = sshll.u32 %s541, 4
          %s549 = int_to_ptr.vmem [resolvable:$true] %s548
          %554 = dma.hbm_to_vmem [thread:$0]  %s547, 256, %s549, %s538, 128, 128, 8
        $region80: #{tpu_custom_call.1} parent=71 // pred_fallthru
          _
      $region72: #{tpu_custom_call.1} parent=5 // pred_fallthru
        _
      %p555 = scmp.le.s32.totalorder 1, %s33
      %p556 = scmp.lt.s32.totalorder %s33, 3
      %p557 = pnand %p555, %p556
      %p558 = pneg %p557
      // Predicated region
      $region81: #{tpu_custom_call.1} parent=5 // pred_check
        _
      $region82: #{tpu_custom_call.1} parent=5 // pred_check_branch
        %560 = sbr.rel (%p557) target = $region84
      $region83: #{tpu_custom_call.1} parent=5 // pred_region
        %s561 = ssub.s32 %s33, 1
        %s562 = sand.u32 %s46, 1
        %s563 = scalar_lea.sflag [#allocation3], %s562
        %s564 = sand.u32 %s46, 1
        %s565 = smul.addr %s564, 8
        %s566 = scalar_lea.vmem [#allocation2], %s565
        // Predicated region
        $region85: #{tpu_custom_call.1} parent=83 // pred_check
          %p567 = pneg %p59
        $region86: #{tpu_custom_call.1} parent=83 // pred_check_branch
          %569 = sbr.rel (%p567) target = $region88
        $region87: #{tpu_custom_call.1} parent=83 // pred_region
          %570 = dma.done %s563, 128
        $region88: #{tpu_custom_call.1} parent=83 // pred_fallthru
          _
        %s571 = sand.u32 %s38, 1
        %s572 = scalar_lea.sflag [#allocation6], %s571
        %s573 = sand.u32 %s72, 1
        %s574 = smul.addr %s573, 16
        %s575 = scalar_lea.vmem [#allocation5], %s574
        // Predicated region
        $region89: #{tpu_custom_call.1} parent=83 // pred_check
          %p576 = pneg %p85
        $region90: #{tpu_custom_call.1} parent=83 // pred_check_branch
          %578 = sbr.rel (%p576) target = $region92
        $region91: #{tpu_custom_call.1} parent=83 // pred_region
          %579 = dma.done %s572, 256
        $region92: #{tpu_custom_call.1} parent=83 // pred_fallthru
          _
        // Predicated region
        $region93: #{tpu_custom_call.1} parent=83 // pred_check
          %p580 = pneg %p190
        $region94: #{tpu_custom_call.1} parent=83 // pred_check_branch
          %582 = sbr.rel (%p580) target = $region96
        $region95: #{tpu_custom_call.1} parent=83 // pred_region
          %583 = dma.done [#allocation6], 1024
        $region96: #{tpu_custom_call.1} parent=83 // pred_fallthru
          _
        // Predicated region
        $region97: #{tpu_custom_call.1} parent=83 // pred_check
          %p584 = pneg %p211
        $region98: #{tpu_custom_call.1} parent=83 // pred_check_branch
          %586 = sbr.rel (%p584) target = $region100
        $region99: #{tpu_custom_call.1} parent=83 // pred_region
          %587 = dma.done [#allocation9], 2048
        $region100: #{tpu_custom_call.1} parent=83 // pred_fallthru
          _
        // Predicated region
        $region101: #{tpu_custom_call.1} parent=83 // pred_check
          %p588 = pneg %p232
        $region102: #{tpu_custom_call.1} parent=83 // pred_check_branch
          %590 = sbr.rel (%p588) target = $region104
        $region103: #{tpu_custom_call.1} parent=83 // pred_region
          %591 = dma.done [#allocation9], 1024
        $region104: #{tpu_custom_call.1} parent=83 // pred_fallthru
          _
        // Predicated region
        $region105: #{tpu_custom_call.1} parent=83 // pred_check
          %p592 = pneg %p316
        $region106: #{tpu_custom_call.1} parent=83 // pred_check_branch
          %594 = sbr.rel (%p592) target = $region108
        $region107: #{tpu_custom_call.1} parent=83 // pred_region
          %595 = dma.done [#allocation12], 4096
        $region108: #{tpu_custom_call.1} parent=83 // pred_fallthru
          _
        // Predicated region
        $region109: #{tpu_custom_call.1} parent=83 // pred_check
          %p596 = pneg %p358
        $region110: #{tpu_custom_call.1} parent=83 // pred_check_branch
          %598 = sbr.rel (%p596) target = $region112
        $region111: #{tpu_custom_call.1} parent=83 // pred_region
          %599 = dma.done [#allocation12], 4096
        $region112: #{tpu_custom_call.1} parent=83 // pred_fallthru
          _
        %s600 = sand.u32 %s46, 1
        %s601 = scalar_lea.sflag [#allocation3], %s600
        %s602 = sand.u32 %s46, 1
        %s603 = smul.addr %s602, 8
        %s604 = scalar_lea.vmem [#allocation2], %s603
        %p605 = pneg %p59
        %p606 = pneg %p56
        %s607 = sand.u32 %s38, 1
        %s608 = scalar_lea.sflag [#allocation6], %s607
        %s609 = sand.u32 %s72, 1
        %s610 = smul.addr %s609, 16
        %s611 = scalar_lea.vmem [#allocation5], %s610
        %p612 = pneg %p85
        %p613 = pneg %p82
        %p614 = pneg %p106
        %p615 = pneg %p103
        %p616 = pneg %p127
        %p617 = pneg %p124
        %p618 = pneg %p148
        %p619 = pneg %p145
        %p620 = pneg %p169
        %p621 = pneg %p166
        %p622 = pneg %p190
        %p623 = pneg %p187
        %p624 = pneg %p211
        %p625 = pneg %p208
        %p626 = pneg %p232
        %p627 = pneg %p229
        %p628 = pneg %p253
        %p629 = pneg %p250
        %p630 = pneg %p274
        %p631 = pneg %p271
        %p632 = pneg %p295
        %p633 = pneg %p292
        %p634 = pneg %p316
        %p635 = pneg %p313
        %p636 = pneg %p337
        %p637 = pneg %p334
        %p638 = pneg %p358
        %p639 = pneg %p355
        %p640 = pneg %p379
        %p641 = pneg %p376
        %p642 = pneg %p405
        %p643 = pneg %p402
        %s644 = sand.u32 %s392, 1
        %s645 = scalar_lea.sflag [#allocation4], %s644
        %s646 = sand.u32 %s392, 1
        %s647 = smul.addr %s646, 8
        %s648 = scalar_lea.vmem [#allocation14], %s647
        %v650 = vld [vmem:[%s566] sm:$0xff]
        %v651 = vld [vmem:[%s575] sm:$0xff]
        %v652 = vld [vmem:[%s575 + $0x8] sm:$0xff]
        %v653 = vld [vmem:[%s2] sm:$0x1]
        %v654 = vld [vmem:[%s3] sm:$0x1]
        %655 = vadd.xlane.f32.xlu0 %v650
        %v656 = vpop.xlane.xlu0 %655
        %v657 = vrcp.pop 128.0
        %v658 = vmul.f32 %v656, %v657
        %v659 = vsub.f32 %v650, %v658
        %v660 = vmul.f32 %v659, %v659
        %661 = vadd.xlane.f32.xlu0 %v660
        %v662 = vpop.xlane.xlu0 %661
        %v663 = vmul.f32 %v662, %v657
        %v664 = vadd.f32 %v663, 1e-05
        %v665 = vrsqrt.pop %v664
        %v666 = vmul.f32 %v659, %v665
        %v668 = vlaneseq
        %v669 = vshrl.u32 %v668, 7
        %v670 = vsub.s32 0, %v669
        %v671 = vrot.slane %v653, %v670
        %v673 = vmul.f32 %v666, %v671
        %v675 = vlaneseq
        %v676 = vshrl.u32 %v675, 7
        %v677 = vsub.s32 0, %v676
        %v678 = vrot.slane %v654, %v677
        %v680 = vadd.f32 %v673, %v678
        %v681 = vld [vmem:[%s4] sm:$0x1]
        %v682 = vld [vmem:[%s5] sm:$0x1]
        %683 = vadd.xlane.f32.xlu0 %v651
        %v684 = vpop.xlane.xlu0 %683
        %685 = vadd.xlane.f32.xlu0 %v652
        %v686 = vpop.xlane.xlu0 %685
        %v687 = vmul.f32 %v684, %v657
        %v688 = vmul.f32 %v686, %v657
        %v689 = vsub.f32 %v651, %v687
        %v690 = vsub.f32 %v652, %v688
        %v691 = vmul.f32 %v689, %v689
        %v692 = vmul.f32 %v690, %v690
        %693 = vadd.xlane.f32.xlu0 %v691
        %v694 = vpop.xlane.xlu0 %693
        %695 = vadd.xlane.f32.xlu0 %v692
        %v696 = vpop.xlane.xlu0 %695
        %v697 = vmul.f32 %v694, %v657
        %v698 = vmul.f32 %v696, %v657
        %v699 = vadd.f32 %v697, 1e-05
        %v700 = vadd.f32 %v698, 1e-05
        %v701 = vrsqrt.pop %v699
        %v702 = vrsqrt.pop %v700
        %v703 = vmul.f32 %v689, %v701
        %v704 = vmul.f32 %v690, %v702
        %v706 = vlaneseq
        %v707 = vshrl.u32 %v706, 7
        %v708 = vsub.s32 0, %v707
        %v709 = vrot.slane %v681, %v708
        %v711 = vmul.f32 %v703, %v709
        %v712 = vmul.f32 %v704, %v709
        %v714 = vlaneseq
        %v715 = vshrl.u32 %v714, 7
        %v716 = vsub.s32 0, %v715
        %v717 = vrot.slane %v682, %v716
        %v719 = vadd.f32 %v711, %v717
        %v720 = vadd.f32 %v712, %v717
        %v721 = vpack.c.bf16 %v680, %v680
        %v722 = vld [vmem:[#allocation7] sm:$0xf]
        %v723 = vld [vmem:[#allocation7 + $0x4] sm:$0xf]
        %v724 = vld [vmem:[#allocation7 + $0x8] sm:$0xf]
        %v725 = vld [vmem:[#allocation7 + $0xc] sm:$0xf]
        %v726 = vld [vmem:[#allocation7 + $0x10] sm:$0xf]
        %v727 = vld [vmem:[#allocation7 + $0x14] sm:$0xf]
        %v728 = vld [vmem:[#allocation7 + $0x18] sm:$0xf]
        %v729 = vld [vmem:[#allocation7 + $0x1c] sm:$0xf]
        %v730 = vld [vmem:[#allocation7 + $0x20] sm:$0xf]
        %v731 = vld [vmem:[#allocation7 + $0x24] sm:$0xf]
        %v732 = vld [vmem:[#allocation7 + $0x28] sm:$0xf]
        %v733 = vld [vmem:[#allocation7 + $0x2c] sm:$0xf]
        %v734 = vld [vmem:[#allocation7 + $0x30] sm:$0xf]
        %v735 = vld [vmem:[#allocation7 + $0x34] sm:$0xf]
        %v736 = vld [vmem:[#allocation7 + $0x38] sm:$0xf]
        %v737 = vld [vmem:[#allocation7 + $0x3c] sm:$0xf]
        %v754 = vunpack.c.l.b16 %v722
        %v755 = vunpack.c.l.b16 %v723
        %v756 = vunpack.c.l.b16 %v724
        %v757 = vunpack.c.l.b16 %v725
        %v758 = vunpack.c.l.b16 %v726
        %v759 = vunpack.c.l.b16 %v727
        %v760 = vunpack.c.l.b16 %v728
        %v761 = vunpack.c.l.b16 %v729
        %v762 = vunpack.c.l.b16 %v730
        %v763 = vunpack.c.l.b16 %v731
        %v764 = vunpack.c.l.b16 %v732
        %v765 = vunpack.c.l.b16 %v733
        %v766 = vunpack.c.l.b16 %v734
        %v767 = vunpack.c.l.b16 %v735
        %v768 = vunpack.c.l.b16 %v736
        %v769 = vunpack.c.l.b16 %v737
        %v770 = vpack.c.b16 %v755, %v754
        %v771 = vpack.c.b16 %v757, %v756
        %v772 = vpack.c.b16 %v759, %v758
        %v773 = vpack.c.b16 %v761, %v760
        %v774 = vpack.c.b16 %v763, %v762
        %v775 = vpack.c.b16 %v765, %v764
        %v776 = vpack.c.b16 %v767, %v766
        %v777 = vpack.c.b16 %v769, %v768
        %786 = vmatprep.subr.bf16.mxu0 0
        %787 = vmatpush1.bf16.msra.mxu0 %v770
        %788 = vmatprep.subr.bf16.mxu0 0
        %789 = vmatpush1.bf16.msra.mxu0 %v771
        %790 = vmatprep.subr.bf16.mxu0 0
        %791 = vmatpush1.bf16.msra.mxu0 %v772
        %792 = vmatprep.subr.bf16.mxu0 0
        %793 = vmatpush1.bf16.msra.mxu0 %v773
        %794 = vmatprep.subr.bf16.mxu0 0
        %795 = vmatpush1.bf16.msra.mxu0 %v774
        %796 = vmatprep.subr.bf16.mxu0 0
        %797 = vmatpush1.bf16.msra.mxu0 %v775
        %798 = vmatprep.subr.bf16.mxu0 0
        %799 = vmatpush1.bf16.msra.mxu0 %v776
        %800 = vmatprep.subr.bf16.mxu0 0
        %801 = vmatpush1.bf16.msra.mxu0 %v777
        %802 = vmatprep.subr.bf16.mxu0 0
        %803 = vmatpush1.bf16.msra.mxu0 0
        %804 = vmatprep.subr.bf16.mxu0 0
        %805 = vmatpush1.bf16.msra.mxu0 0
        %806 = vmatprep.subr.bf16.mxu0 0
        %807 = vmatpush1.bf16.msra.mxu0 0
        %808 = vmatprep.subr.bf16.mxu0 0
        %809 = vmatpush1.bf16.msra.mxu0 0
        %810 = vmatprep.subr.bf16.mxu0 0
        %811 = vmatpush1.bf16.msra.mxu0 0
        %812 = vmatprep.subr.bf16.mxu0 0
        %813 = vmatpush1.bf16.msra.mxu0 0
        %814 = vmatprep.subr.bf16.mxu0 0
        %815 = vmatpush1.bf16.msra.mxu0 0
        %816 = vmatprep.subr.bf16.mxu0 0
        %817 = vmatpush1.bf16.msra.mxu0 0
        %818 = vmatprep.mubr.bf16.mxu0 0
        %819 = vmatmul.mubr.bf16.gmra.mrb[0].mxu0 %v721
        %v820 = vpop.f32.mrb[0].mxu0
        %v821 = vadd.f32 0.0, %v820
        %v822 = vpop.f32.mrb[0].mxu0
        %v823 = vpop.f32.mrb[0].mxu0
        %v824 = vpop.f32.mrb[0].mxu0
        %825 = vdwg.mxu0
        %v826 = vpack.c.bf16 %v720, %v719
        %v827 = vld [vmem:[#allocation8] sm:$0xff]
        %v828 = vld [vmem:[#allocation8 + $0x8] sm:$0xff]
        %v829 = vld [vmem:[#allocation8 + $0x10] sm:$0xff]
        %v830 = vld [vmem:[#allocation8 + $0x18] sm:$0xff]
        %v831 = vld [vmem:[#allocation8 + $0x20] sm:$0xff]
        %v832 = vld [vmem:[#allocation8 + $0x28] sm:$0xff]
        %v833 = vld [vmem:[#allocation8 + $0x30] sm:$0xff]
        %v834 = vld [vmem:[#allocation8 + $0x38] sm:$0xff]
        %v835 = vld [vmem:[#allocation8 + $0x40] sm:$0xff]
        %v836 = vld [vmem:[#allocation8 + $0x48] sm:$0xff]
        %v837 = vld [vmem:[#allocation8 + $0x50] sm:$0xff]
        %v838 = vld [vmem:[#allocation8 + $0x58] sm:$0xff]
        %v839 = vld [vmem:[#allocation8 + $0x60] sm:$0xff]
        %v840 = vld [vmem:[#allocation8 + $0x68] sm:$0xff]
        %v841 = vld [vmem:[#allocation8 + $0x70] sm:$0xff]
        %v842 = vld [vmem:[#allocation8 + $0x78] sm:$0xff]
        %v859 = vunpack.c.l.b16 %v827
        %v860 = vunpack.c.h.b16 %v827
        %v861 = vunpack.c.l.b16 %v828
        %v862 = vunpack.c.h.b16 %v828
        %v863 = vunpack.c.l.b16 %v829
        %v864 = vunpack.c.h.b16 %v829
        %v865 = vunpack.c.l.b16 %v830
        %v866 = vunpack.c.h.b16 %v830
        %v867 = vunpack.c.l.b16 %v831
        %v868 = vunpack.c.h.b16 %v831
        %v869 = vunpack.c.l.b16 %v832
        %v870 = vunpack.c.h.b16 %v832
        %v871 = vunpack.c.l.b16 %v833
        %v872 = vunpack.c.h.b16 %v833
        %v873 = vunpack.c.l.b16 %v834
        %v874 = vunpack.c.h.b16 %v834
        %v875 = vunpack.c.l.b16 %v835
        %v876 = vunpack.c.h.b16 %v835
        %v877 = vunpack.c.l.b16 %v836
        %v878 = vunpack.c.h.b16 %v836
        %v879 = vunpack.c.l.b16 %v837
        %v880 = vunpack.c.h.b16 %v837
        %v881 = vunpack.c.l.b16 %v838
        %v882 = vunpack.c.h.b16 %v838
        %v883 = vunpack.c.l.b16 %v839
        %v884 = vunpack.c.h.b16 %v839
        %v885 = vunpack.c.l.b16 %v840
        %v886 = vunpack.c.h.b16 %v840
        %v887 = vunpack.c.l.b16 %v841
        %v888 = vunpack.c.h.b16 %v841
        %v889 = vunpack.c.l.b16 %v842
        %v890 = vunpack.c.h.b16 %v842
        %v891 = vpack.c.b16 %v861, %v859
        %v892 = vpack.c.b16 %v862, %v860
        %v893 = vpack.c.b16 %v865, %v863
        %v894 = vpack.c.b16 %v866, %v864
        %v895 = vpack.c.b16 %v869, %v867
        %v896 = vpack.c.b16 %v870, %v868
        %v897 = vpack.c.b16 %v873, %v871
        %v898 = vpack.c.b16 %v874, %v872
        %v899 = vpack.c.b16 %v877, %v875
        %v900 = vpack.c.b16 %v878, %v876
        %v901 = vpack.c.b16 %v881, %v879
        %v902 = vpack.c.b16 %v882, %v880
        %v903 = vpack.c.b16 %v885, %v883
        %v904 = vpack.c.b16 %v886, %v884
        %v905 = vpack.c.b16 %v889, %v887
        %v906 = vpack.c.b16 %v890, %v888
        %923 = vmatprep.subr.bf16.mxu0 %v892
        %924 = vmatpush1.bf16.msra.mxu0 %v891
        %925 = vmatprep.subr.bf16.mxu0 %v894
        %926 = vmatpush1.bf16.msra.mxu0 %v893
        %927 = vmatprep.subr.bf16.mxu0 %v896
        %928 = vmatpush1.bf16.msra.mxu0 %v895
        %929 = vmatprep.subr.bf16.mxu0 %v898
        %930 = vmatpush1.bf16.msra.mxu0 %v897
        %931 = vmatprep.subr.bf16.mxu0 %v900
        %932 = vmatpush1.bf16.msra.mxu0 %v899
        %933 = vmatprep.subr.bf16.mxu0 %v902
        %934 = vmatpush1.bf16.msra.mxu0 %v901
        %935 = vmatprep.subr.bf16.mxu0 %v904
        %936 = vmatpush1.bf16.msra.mxu0 %v903
        %937 = vmatprep.subr.bf16.mxu0 %v906
        %938 = vmatpush1.bf16.msra.mxu0 %v905
        %939 = vmatprep.subr.bf16.mxu0 0
        %940 = vmatpush1.bf16.msra.mxu0 0
        %941 = vmatprep.subr.bf16.mxu0 0
        %942 = vmatpush1.bf16.msra.mxu0 0
        %943 = vmatprep.subr.bf16.mxu0 0
        %944 = vmatpush1.bf16.msra.mxu0 0
        %945 = vmatprep.subr.bf16.mxu0 0
        %946 = vmatpush1.bf16.msra.mxu0 0
        %947 = vmatprep.subr.bf16.mxu0 0
        %948 = vmatpush1.bf16.msra.mxu0 0
        %949 = vmatprep.subr.bf16.mxu0 0
        %950 = vmatpush1.bf16.msra.mxu0 0
        %951 = vmatprep.subr.bf16.mxu0 0
        %952 = vmatpush1.bf16.msra.mxu0 0
        %953 = vmatprep.subr.bf16.mxu0 0
        %954 = vmatpush1.bf16.msra.mxu0 0
        %955 = vmatprep.mubr.bf16.mxu0 0
        %956 = vmatmul.mubr.bf16.gmra.mrb[0].mxu0 %v826
        %v957 = vpop.f32.mrb[0].mxu0
        %v958 = vadd.f32 0.0, %v957
        %v959 = vpop.f32.mrb[0].mxu0
        %v960 = vadd.f32 0.0, %v959
        %v961 = vpop.f32.mrb[0].mxu0
        %v962 = vadd.f32 0.0, %v961
        %v963 = vpop.f32.mrb[0].mxu0
        %v964 = vadd.f32 0.0, %v963
        %965 = vdwg.mxu0
        %v966 = vpack.c.bf16 %v821, %v821
        %v967 = vpack.c.bf16 %v962, %v958
        %vm968 = vcmask 261120
        %v970 = vsel %vm968, %v966, 0
        %v973 = vsel %vm968, %v967, 0
        %975 = vmatprep.subr.bf16.mxu0 0
        %976 = vmatpush1.bf16.xpose.msra.mxu0 %v973
        %977 = vmatprep.subr.bf16.mxu0 0
        %978 = vmatpush1.bf16.xpose.msra.mxu0 0
        %979 = vmatprep.subr.bf16.mxu0 0
        %980 = vmatpush1.bf16.xpose.msra.mxu0 0
        %981 = vmatprep.subr.bf16.mxu0 0
        %982 = vmatpush1.bf16.xpose.msra.mxu0 0
        %983 = vmatprep.subr.bf16.mxu0 0
        %984 = vmatpush1.bf16.xpose.msra.mxu0 0
        %985 = vmatprep.subr.bf16.mxu0 0
        %986 = vmatpush1.bf16.xpose.msra.mxu0 0
        %987 = vmatprep.subr.bf16.mxu0 0
        %988 = vmatpush1.bf16.xpose.msra.mxu0 0
        %989 = vmatprep.subr.bf16.mxu0 0
        %990 = vmatpush1.bf16.xpose.msra.mxu0 0
        %991 = vmatprep.subr.bf16.mxu0 0
        %992 = vmatpush1.bf16.xpose.msra.mxu0 0
        %993 = vmatprep.subr.bf16.mxu0 0
        %994 = vmatpush1.bf16.xpose.msra.mxu0 0
        %995 = vmatprep.subr.bf16.mxu0 0
        %996 = vmatpush1.bf16.xpose.msra.mxu0 0
        %997 = vmatprep.subr.bf16.mxu0 0
        %998 = vmatpush1.bf16.xpose.msra.mxu0 0
        %999 = vmatprep.subr.bf16.mxu0 0
        %1000 = vmatpush1.bf16.xpose.msra.mxu0 0
        %1001 = vmatprep.subr.bf16.mxu0 0
        %1002 = vmatpush1.bf16.xpose.msra.mxu0 0
        %1003 = vmatprep.subr.bf16.mxu0 0
        %1004 = vmatpush1.bf16.xpose.msra.mxu0 0
        %1005 = vmatprep.subr.bf16.mxu0 0
        %1006 = vmatpush1.bf16.xpose.msra.mxu0 0
        %1007 = vmatprep.mubr.bf16.mxu0 0
        %1008 = vmatmul.mubr.bf16.gmra.mrb[0].mxu0 %v970
        %v1009 = vpop.f32.mrb[0].mxu0
        %v1010 = vadd.f32 0.0, %v1009
        %v1011 = vpop.f32.mrb[0].mxu0
        %v1012 = vpop.f32.mrb[0].mxu0
        %v1013 = vpop.f32.mrb[0].mxu0
        %1014 = vdwg.mxu0
        %vm1015 = vcmask 130048
        %v1016 = vsel %vm1015, %v1010, -inf
        %1017 = vmax.xlane.f32.xlu0 %v1016
        %v1018 = vpop.xlane.xlu0 %1017
        %v1019 = vsub.f32 %v1010, %v1018
        %v1020 = vmul.f32 %v1019, 1.442695
        %v1021 = vpow.pop %v1020
        %v1022 = vsel %vm1015, %v1021, 0.0
        %1023 = vadd.xlane.f32.xlu0 %v1022
        %v1024 = vpop.xlane.xlu0 %1023
        %v1025 = vrcp.pop %v1024
        %v1026 = vmul.f32 %v1021, %v1025
        %v1027 = vpack.c.bf16 %v1026, %v1026
        %v1028 = vpack.c.bf16 %v964, %v960
        %v1030 = vsel %vm1015, %v1027, 0
        %1032 = vmatprep.subr.bf16.mxu0 0
        %1033 = vmatpush1.bf16.msra.mxu0 %v1028
        %1034 = vmatprep.subr.bf16.mxu0 0
        %1035 = vmatpush1.bf16.msra.mxu0 0
        %1036 = vmatprep.subr.bf16.mxu0 0
        %1037 = vmatpush1.bf16.msra.mxu0 0
        %1038 = vmatprep.subr.bf16.mxu0 0
        %1039 = vmatpush1.bf16.msra.mxu0 0
        %1040 = vmatprep.subr.bf16.mxu0 0
        %1041 = vmatpush1.bf16.msra.mxu0 0
        %1042 = vmatprep.subr.bf16.mxu0 0
        %1043 = vmatpush1.bf16.msra.mxu0 0
        %1044 = vmatprep.subr.bf16.mxu0 0
        %1045 = vmatpush1.bf16.msra.mxu0 0
        %1046 = vmatprep.subr.bf16.mxu0 0
        %1047 = vmatpush1.bf16.msra.mxu0 0
        %1048 = vmatprep.subr.bf16.mxu0 0
        %1049 = vmatpush1.bf16.msra.mxu0 0
        %1050 = vmatprep.subr.bf16.mxu0 0
        %1051 = vmatpush1.bf16.msra.mxu0 0
        %1052 = vmatprep.subr.bf16.mxu0 0
        %1053 = vmatpush1.bf16.msra.mxu0 0
        %1054 = vmatprep.subr.bf16.mxu0 0
        %1055 = vmatpush1.bf16.msra.mxu0 0
        %1056 = vmatprep.subr.bf16.mxu0 0
        %1057 = vmatpush1.bf16.msra.mxu0 0
        %1058 = vmatprep.subr.bf16.mxu0 0
        %1059 = vmatpush1.bf16.msra.mxu0 0
        %1060 = vmatprep.subr.bf16.mxu0 0
        %1061 = vmatpush1.bf16.msra.mxu0 0
        %1062 = vmatprep.subr.bf16.mxu0 0
        %1063 = vmatpush1.bf16.msra.mxu0 0
        %1064 = vmatprep.mubr.bf16.mxu0 0
        %1065 = vmatmul.mubr.bf16.gmra.mrb[0].mxu0 %v1030
        %v1066 = vpop.f32.mrb[0].mxu0
        %v1067 = vadd.f32 0.0, %v1066
        %v1068 = vpop.f32.mrb[0].mxu0
        %v1069 = vpop.f32.mrb[0].mxu0
        %v1070 = vpop.f32.mrb[0].mxu0
        %1071 = vdwg.mxu0
        %1073 = vrot.lane.b32.xlu0 %v966, 96
        %v1074 = vpop.permute.xlu0 %1073
        %1076 = vrot.lane.b32.xlu0 %v967, 96
        %v1077 = vpop.permute.xlu0 %1076
        %v1079 = vsel %vm968, %v1074, 0
        %v1082 = vsel %vm968, %v1077, 0
        %1084 = vmatprep.subr.bf16.mxu0 0
        %1085 = vmatpush1.bf16.xpose.msra.mxu0 %v1082
        %1086 = vmatprep.subr.bf16.mxu0 0
        %1087 = vmatpush1.bf16.xpose.msra.mxu0 0
        %1088 = vmatprep.subr.bf16.mxu0 0
        %1089 = vmatpush1.bf16.xpose.msra.mxu0 0
        %1090 = vmatprep.subr.bf16.mxu0 0
        %1091 = vmatpush1.bf16.xpose.msra.mxu0 0
        %1092 = vmatprep.subr.bf16.mxu0 0
        %1093 = vmatpush1.bf16.xpose.msra.mxu0 0
        %1094 = vmatprep.subr.bf16.mxu0 0
        %1095 = vmatpush1.bf16.xpose.msra.mxu0 0
        %1096 = vmatprep.subr.bf16.mxu0 0
        %1097 = vmatpush1.bf16.xpose.msra.mxu0 0
        %1098 = vmatprep.subr.bf16.mxu0 0
        %1099 = vmatpush1.bf16.xpose.msra.mxu0 0
        %1100 = vmatprep.subr.bf16.mxu0 0
        %1101 = vmatpush1.bf16.xpose.msra.mxu0 0
        %1102 = vmatprep.subr.bf16.mxu0 0
        %1103 = vmatpush1.bf16.xpose.msra.mxu0 0
        %1104 = vmatprep.subr.bf16.mxu0 0
        %1105 = vmatpush1.bf16.xpose.msra.mxu0 0
        %1106 = vmatprep.subr.bf16.mxu0 0
        %1107 = vmatpush1.bf16.xpose.msra.mxu0 0
        %1108 = vmatprep.subr.bf16.mxu0 0
        %1109 = vmatpush1.bf16.xpose.msra.mxu0 0
        %1110 = vmatprep.subr.bf16.mxu0 0
        %1111 = vmatpush1.bf16.xpose.msra.mxu0 0
        %1112 = vmatprep.subr.bf16.mxu0 0
        %1113 = vmatpush1.bf16.xpose.msra.mxu0 0
        %1114 = vmatprep.subr.bf16.mxu0 0
        %1115 = vmatpush1.bf16.xpose.msra.mxu0 0
        %1116 = vmatprep.mubr.bf16.mxu0 0
        %1117 = vmatmul.mubr.bf16.gmra.mrb[0].mxu0 %v1079
        %v1118 = vpop.f32.mrb[0].mxu0
        %v1119 = vadd.f32 0.0, %v1118
        %v1120 = vpop.f32.mrb[0].mxu0
        %v1121 = vpop.f32.mrb[0].mxu0
        %v1122 = vpop.f32.mrb[0].mxu0
        %1123 = vdwg.mxu0
        %v1124 = vsel %vm1015, %v1119, -inf
        %1125 = vmax.xlane.f32.xlu0 %v1124
        %v1126 = vpop.xlane.xlu0 %1125
        %v1127 = vsub.f32 %v1119, %v1126
        %v1128 = vmul.f32 %v1127, 1.442695
        %v1129 = vpow.pop %v1128
        %v1130 = vsel %vm1015, %v1129, 0.0
        %1131 = vadd.xlane.f32.xlu0 %v1130
        %v1132 = vpop.xlane.xlu0 %1131
        %v1133 = vrcp.pop %v1132
        %v1134 = vmul.f32 %v1129, %v1133
        %v1135 = vpack.c.bf16 %v1134, %v1134
        %1137 = vrot.lane.b32.xlu0 %v1028, 96
        %v1138 = vpop.permute.xlu0 %1137
        %v1141 = vsel %vm1015, %v1135, 0
        %1143 = vmatprep.subr.bf16.mxu0 0
        %1144 = vmatpush1.bf16.msra.mxu0 %v1138
        %1145 = vmatprep.subr.bf16.mxu0 0
        %1146 = vmatpush1.bf16.msra.mxu0 0
        %1147 = vmatprep.subr.bf16.mxu0 0
        %1148 = vmatpush1.bf16.msra.mxu0 0
        %1149 = vmatprep.subr.bf16.mxu0 0
        %1150 = vmatpush1.bf16.msra.mxu0 0
        %1151 = vmatprep.subr.bf16.mxu0 0
        %1152 = vmatpush1.bf16.msra.mxu0 0
        %1153 = vmatprep.subr.bf16.mxu0 0
        %1154 = vmatpush1.bf16.msra.mxu0 0
        %1155 = vmatprep.subr.bf16.mxu0 0
        %1156 = vmatpush1.bf16.msra.mxu0 0
        %1157 = vmatprep.subr.bf16.mxu0 0
        %1158 = vmatpush1.bf16.msra.mxu0 0
        %1159 = vmatprep.subr.bf16.mxu0 0
        %1160 = vmatpush1.bf16.msra.mxu0 0
        %1161 = vmatprep.subr.bf16.mxu0 0
        %1162 = vmatpush1.bf16.msra.mxu0 0
        %1163 = vmatprep.subr.bf16.mxu0 0
        %1164 = vmatpush1.bf16.msra.mxu0 0
        %1165 = vmatprep.subr.bf16.mxu0 0
        %1166 = vmatpush1.bf16.msra.mxu0 0
        %1167 = vmatprep.subr.bf16.mxu0 0
        %1168 = vmatpush1.bf16.msra.mxu0 0
        %1169 = vmatprep.subr.bf16.mxu0 0
        %1170 = vmatpush1.bf16.msra.mxu0 0
        %1171 = vmatprep.subr.bf16.mxu0 0
        %1172 = vmatpush1.bf16.msra.mxu0 0
        %1173 = vmatprep.subr.bf16.mxu0 0
        %1174 = vmatpush1.bf16.msra.mxu0 0
        %1175 = vmatprep.mubr.bf16.mxu0 0
        %1176 = vmatmul.mubr.bf16.gmra.mrb[0].mxu0 %v1141
        %v1177 = vpop.f32.mrb[0].mxu0
        %v1178 = vadd.f32 0.0, %v1177
        %v1179 = vpop.f32.mrb[0].mxu0
        %v1180 = vpop.f32.mrb[0].mxu0
        %v1181 = vpop.f32.mrb[0].mxu0
        %1182 = vdwg.mxu0
        %1183 = vrot.lane.b32.xlu0 %v966, 64
        %v1184 = vpop.permute.xlu0 %1183
        %1185 = vrot.lane.b32.xlu0 %v967, 64
        %v1186 = vpop.permute.xlu0 %1185
        %v1188 = vsel %vm968, %v1184, 0
        %v1191 = vsel %vm968, %v1186, 0
        %1193 = vmatprep.subr.bf16.mxu0 0
        %1194 = vmatpush1.bf16.xpose.msra.mxu0 %v1191
        %1195 = vmatprep.subr.bf16.mxu0 0
        %1196 = vmatpush1.bf16.xpose.msra.mxu0 0
        %1197 = vmatprep.subr.bf16.mxu0 0
        %1198 = vmatpush1.bf16.xpose.msra.mxu0 0
        %1199 = vmatprep.subr.bf16.mxu0 0
        %1200 = vmatpush1.bf16.xpose.msra.mxu0 0
        %1201 = vmatprep.subr.bf16.mxu0 0
        %1202 = vmatpush1.bf16.xpose.msra.mxu0 0
        %1203 = vmatprep.subr.bf16.mxu0 0
        %1204 = vmatpush1.bf16.xpose.msra.mxu0 0
        %1205 = vmatprep.subr.bf16.mxu0 0
        %1206 = vmatpush1.bf16.xpose.msra.mxu0 0
        %1207 = vmatprep.subr.bf16.mxu0 0
        %1208 = vmatpush1.bf16.xpose.msra.mxu0 0
        %1209 = vmatprep.subr.bf16.mxu0 0
        %1210 = vmatpush1.bf16.xpose.msra.mxu0 0
        %1211 = vmatprep.subr.bf16.mxu0 0
        %1212 = vmatpush1.bf16.xpose.msra.mxu0 0
        %1213 = vmatprep.subr.bf16.mxu0 0
        %1214 = vmatpush1.bf16.xpose.msra.mxu0 0
        %1215 = vmatprep.subr.bf16.mxu0 0
        %1216 = vmatpush1.bf16.xpose.msra.mxu0 0
        %1217 = vmatprep.subr.bf16.mxu0 0
        %1218 = vmatpush1.bf16.xpose.msra.mxu0 0
        %1219 = vmatprep.subr.bf16.mxu0 0
        %1220 = vmatpush1.bf16.xpose.msra.mxu0 0
        %1221 = vmatprep.subr.bf16.mxu0 0
        %1222 = vmatpush1.bf16.xpose.msra.mxu0 0
        %1223 = vmatprep.subr.bf16.mxu0 0
        %1224 = vmatpush1.bf16.xpose.msra.mxu0 0
        %1225 = vmatprep.mubr.bf16.mxu0 0
        %1226 = vmatmul.mubr.bf16.gmra.mrb[0].mxu0 %v1188
        %v1227 = vpop.f32.mrb[0].mxu0
        %v1228 = vadd.f32 0.0, %v1227
        %v1229 = vpop.f32.mrb[0].mxu0
        %v1230 = vpop.f32.mrb[0].mxu0
        %v1231 = vpop.f32.mrb[0].mxu0
        %1232 = vdwg.mxu0
        %v1233 = vsel %vm1015, %v1228, -inf
        %1234 = vmax.xlane.f32.xlu0 %v1233
        %v1235 = vpop.xlane.xlu0 %1234
        %v1236 = vsub.f32 %v1228, %v1235
        %v1237 = vmul.f32 %v1236, 1.442695
        %v1238 = vpow.pop %v1237
        %v1239 = vsel %vm1015, %v1238, 0.0
        %1240 = vadd.xlane.f32.xlu0 %v1239
        %v1241 = vpop.xlane.xlu0 %1240
        %v1242 = vrcp.pop %v1241
        %v1243 = vmul.f32 %v1238, %v1242
        %v1244 = vpack.c.bf16 %v1243, %v1243
        %1245 = vrot.lane.b32.xlu0 %v1028, 64
        %v1246 = vpop.permute.xlu0 %1245
        %v1249 = vsel %vm1015, %v1244, 0
        %1251 = vmatprep.subr.bf16.mxu0 0
        %1252 = vmatpush1.bf16.msra.mxu0 %v1246
        %1253 = vmatprep.subr.bf16.mxu0 0
        %1254 = vmatpush1.bf16.msra.mxu0 0
        %1255 = vmatprep.subr.bf16.mxu0 0
        %1256 = vmatpush1.bf16.msra.mxu0 0
        %1257 = vmatprep.subr.bf16.mxu0 0
        %1258 = vmatpush1.bf16.msra.mxu0 0
        %1259 = vmatprep.subr.bf16.mxu0 0
        %1260 = vmatpush1.bf16.msra.mxu0 0
        %1261 = vmatprep.subr.bf16.mxu0 0
        %1262 = vmatpush1.bf16.msra.mxu0 0
        %1263 = vmatprep.subr.bf16.mxu0 0
        %1264 = vmatpush1.bf16.msra.mxu0 0
        %1265 = vmatprep.subr.bf16.mxu0 0
        %1266 = vmatpush1.bf16.msra.mxu0 0
        %1267 = vmatprep.subr.bf16.mxu0 0
        %1268 = vmatpush1.bf16.msra.mxu0 0
        %1269 = vmatprep.subr.bf16.mxu0 0
        %1270 = vmatpush1.bf16.msra.mxu0 0
        %1271 = vmatprep.subr.bf16.mxu0 0
        %1272 = vmatpush1.bf16.msra.mxu0 0
        %1273 = vmatprep.subr.bf16.mxu0 0
        %1274 = vmatpush1.bf16.msra.mxu0 0
        %1275 = vmatprep.subr.bf16.mxu0 0
        %1276 = vmatpush1.bf16.msra.mxu0 0
        %1277 = vmatprep.subr.bf16.mxu0 0
        %1278 = vmatpush1.bf16.msra.mxu0 0
        %1279 = vmatprep.subr.bf16.mxu0 0
        %1280 = vmatpush1.bf16.msra.mxu0 0
        %1281 = vmatprep.subr.bf16.mxu0 0
        %1282 = vmatpush1.bf16.msra.mxu0 0
        %1283 = vmatprep.mubr.bf16.mxu0 0
        %1284 = vmatmul.mubr.bf16.gmra.mrb[0].mxu0 %v1249
        %v1285 = vpop.f32.mrb[0].mxu0
        %v1286 = vadd.f32 0.0, %v1285
        %v1287 = vpop.f32.mrb[0].mxu0
        %v1288 = vpop.f32.mrb[0].mxu0
        %v1289 = vpop.f32.mrb[0].mxu0
        %1290 = vdwg.mxu0
        %1291 = vrot.lane.b32.xlu0 %v966, 32
        %v1292 = vpop.permute.xlu0 %1291
        %1293 = vrot.lane.b32.xlu0 %v967, 32
        %v1294 = vpop.permute.xlu0 %1293
        %v1296 = vsel %vm968, %v1292, 0
        %v1299 = vsel %vm968, %v1294, 0
        %1301 = vmatprep.subr.bf16.mxu0 0
        %1302 = vmatpush1.bf16.xpose.msra.mxu0 %v1299
        %1303 = vmatprep.subr.bf16.mxu0 0
        %1304 = vmatpush1.bf16.xpose.msra.mxu0 0
        %1305 = vmatprep.subr.bf16.mxu0 0
        %1306 = vmatpush1.bf16.xpose.msra.mxu0 0
        %1307 = vmatprep.subr.bf16.mxu0 0
        %1308 = vmatpush1.bf16.xpose.msra.mxu0 0
        %1309 = vmatprep.subr.bf16.mxu0 0
        %1310 = vmatpush1.bf16.xpose.msra.mxu0 0
        %1311 = vmatprep.subr.bf16.mxu0 0
        %1312 = vmatpush1.bf16.xpose.msra.mxu0 0
        %1313 = vmatprep.subr.bf16.mxu0 0
        %1314 = vmatpush1.bf16.xpose.msra.mxu0 0
        %1315 = vmatprep.subr.bf16.mxu0 0
        %1316 = vmatpush1.bf16.xpose.msra.mxu0 0
        %1317 = vmatprep.subr.bf16.mxu0 0
        %1318 = vmatpush1.bf16.xpose.msra.mxu0 0
        %1319 = vmatprep.subr.bf16.mxu0 0
        %1320 = vmatpush1.bf16.xpose.msra.mxu0 0
        %1321 = vmatprep.subr.bf16.mxu0 0
        %1322 = vmatpush1.bf16.xpose.msra.mxu0 0
        %1323 = vmatprep.subr.bf16.mxu0 0
        %1324 = vmatpush1.bf16.xpose.msra.mxu0 0
        %1325 = vmatprep.subr.bf16.mxu0 0
        %1326 = vmatpush1.bf16.xpose.msra.mxu0 0
        %1327 = vmatprep.subr.bf16.mxu0 0
        %1328 = vmatpush1.bf16.xpose.msra.mxu0 0
        %1329 = vmatprep.subr.bf16.mxu0 0
        %1330 = vmatpush1.bf16.xpose.msra.mxu0 0
        %1331 = vmatprep.subr.bf16.mxu0 0
        %1332 = vmatpush1.bf16.xpose.msra.mxu0 0
        %1333 = vmatprep.mubr.bf16.mxu0 0
        %1334 = vmatmul.mubr.bf16.gmra.mrb[0].mxu0 %v1296
        %v1335 = vpop.f32.mrb[0].mxu0
        %v1336 = vadd.f32 0.0, %v1335
        %v1337 = vpop.f32.mrb[0].mxu0
        %v1338 = vpop.f32.mrb[0].mxu0
        %v1339 = vpop.f32.mrb[0].mxu0
        %1340 = vdwg.mxu0
        %v1341 = vsel %vm1015, %v1336, -inf
        %1342 = vmax.xlane.f32.xlu0 %v1341
        %v1343 = vpop.xlane.xlu0 %1342
        %v1344 = vsub.f32 %v1336, %v1343
        %v1345 = vmul.f32 %v1344, 1.442695
        %v1346 = vpow.pop %v1345
        %v1347 = vsel %vm1015, %v1346, 0.0
        %1348 = vadd.xlane.f32.xlu0 %v1347
        %v1349 = vpop.xlane.xlu0 %1348
        %v1350 = vrcp.pop %v1349
        %v1351 = vmul.f32 %v1346, %v1350
        %v1352 = vpack.c.bf16 %v1351, %v1351
        %1353 = vrot.lane.b32.xlu0 %v1028, 32
        %v1354 = vpop.permute.xlu0 %1353
        %v1357 = vsel %vm1015, %v1352, 0
        %1359 = vmatprep.subr.bf16.mxu0 0
        %1360 = vmatpush1.bf16.msra.mxu0 %v1354
        %1361 = vmatprep.subr.bf16.mxu0 0
        %1362 = vmatpush1.bf16.msra.mxu0 0
        %1363 = vmatprep.subr.bf16.mxu0 0
        %1364 = vmatpush1.bf16.msra.mxu0 0
        %1365 = vmatprep.subr.bf16.mxu0 0
        %1366 = vmatpush1.bf16.msra.mxu0 0
        %1367 = vmatprep.subr.bf16.mxu0 0
        %1368 = vmatpush1.bf16.msra.mxu0 0
        %1369 = vmatprep.subr.bf16.mxu0 0
        %1370 = vmatpush1.bf16.msra.mxu0 0
        %1371 = vmatprep.subr.bf16.mxu0 0
        %1372 = vmatpush1.bf16.msra.mxu0 0
        %1373 = vmatprep.subr.bf16.mxu0 0
        %1374 = vmatpush1.bf16.msra.mxu0 0
        %1375 = vmatprep.subr.bf16.mxu0 0
        %1376 = vmatpush1.bf16.msra.mxu0 0
        %1377 = vmatprep.subr.bf16.mxu0 0
        %1378 = vmatpush1.bf16.msra.mxu0 0
        %1379 = vmatprep.subr.bf16.mxu0 0
        %1380 = vmatpush1.bf16.msra.mxu0 0
        %1381 = vmatprep.subr.bf16.mxu0 0
        %1382 = vmatpush1.bf16.msra.mxu0 0
        %1383 = vmatprep.subr.bf16.mxu0 0
        %1384 = vmatpush1.bf16.msra.mxu0 0
        %1385 = vmatprep.subr.bf16.mxu0 0
        %1386 = vmatpush1.bf16.msra.mxu0 0
        %1387 = vmatprep.subr.bf16.mxu0 0
        %1388 = vmatpush1.bf16.msra.mxu0 0
        %1389 = vmatprep.subr.bf16.mxu0 0
        %1390 = vmatpush1.bf16.msra.mxu0 0
        %1391 = vmatprep.mubr.bf16.mxu0 0
        %1392 = vmatmul.mubr.bf16.gmra.mrb[0].mxu0 %v1357
        %v1393 = vpop.f32.mrb[0].mxu0
        %v1394 = vadd.f32 0.0, %v1393
        %v1395 = vpop.f32.mrb[0].mxu0
        %v1396 = vpop.f32.mrb[0].mxu0
        %v1397 = vpop.f32.mrb[0].mxu0
        %1398 = vdwg.mxu0
        %1400 = vrot.lane.b32.xlu0 %v1178, 32
        %v1401 = vpop.permute.xlu0 %1400
        %1404 = vrot.lane.b32.xlu0 %v1286, 64
        %v1405 = vpop.permute.xlu0 %1404
        %1408 = vrot.lane.b32.xlu0 %v1394, 96
        %v1409 = vpop.permute.xlu0 %1408
        %v1411 = vsel %vm968, %v1067, %v1401
        %vm1412 = vcmask 523264
        %v1413 = vsel %vm1412, %v1411, %v1405
        %vm1414 = vcmask 785408
        %v1415 = vsel %vm1414, %v1413, %v1409
        %v1416 = vld [vmem:[%s9] sm:$0x1]
        %v1418 = vlaneseq
        %v1419 = vshrl.u32 %v1418, 7
        %v1420 = vsub.s32 0, %v1419
        %v1421 = vrot.slane %v1416, %v1420
        %v1423 = vadd.f32 %v650, %v1421
        %v1424 = vpack.c.bf16 %v1415, %v1415
        %v1425 = vld [vmem:[#allocation10] sm:$0xf]
        %v1426 = vld [vmem:[#allocation10 + $0x4] sm:$0xf]
        %v1427 = vld [vmem:[#allocation10 + $0x8] sm:$0xf]
        %v1428 = vld [vmem:[#allocation10 + $0xc] sm:$0xf]
        %v1429 = vld [vmem:[#allocation10 + $0x10] sm:$0xf]
        %v1430 = vld [vmem:[#allocation10 + $0x14] sm:$0xf]
        %v1431 = vld [vmem:[#allocation10 + $0x18] sm:$0xf]
        %v1432 = vld [vmem:[#allocation10 + $0x1c] sm:$0xf]
        %v1433 = vld [vmem:[#allocation10 + $0x20] sm:$0xf]
        %v1434 = vld [vmem:[#allocation10 + $0x24] sm:$0xf]
        %v1435 = vld [vmem:[#allocation10 + $0x28] sm:$0xf]
        %v1436 = vld [vmem:[#allocation10 + $0x2c] sm:$0xf]
        %v1437 = vld [vmem:[#allocation10 + $0x30] sm:$0xf]
        %v1438 = vld [vmem:[#allocation10 + $0x34] sm:$0xf]
        %v1439 = vld [vmem:[#allocation10 + $0x38] sm:$0xf]
        %v1440 = vld [vmem:[#allocation10 + $0x3c] sm:$0xf]
        %v1457 = vunpack.c.l.b16 %v1425
        %v1458 = vunpack.c.l.b16 %v1426
        %v1459 = vunpack.c.l.b16 %v1427
        %v1460 = vunpack.c.l.b16 %v1428
        %v1461 = vunpack.c.l.b16 %v1429
        %v1462 = vunpack.c.l.b16 %v1430
        %v1463 = vunpack.c.l.b16 %v1431
        %v1464 = vunpack.c.l.b16 %v1432
        %v1465 = vunpack.c.l.b16 %v1433
        %v1466 = vunpack.c.l.b16 %v1434
        %v1467 = vunpack.c.l.b16 %v1435
        %v1468 = vunpack.c.l.b16 %v1436
        %v1469 = vunpack.c.l.b16 %v1437
        %v1470 = vunpack.c.l.b16 %v1438
        %v1471 = vunpack.c.l.b16 %v1439
        %v1472 = vunpack.c.l.b16 %v1440
        %v1473 = vpack.c.b16 %v1458, %v1457
        %v1474 = vpack.c.b16 %v1460, %v1459
        %v1475 = vpack.c.b16 %v1462, %v1461
        %v1476 = vpack.c.b16 %v1464, %v1463
        %v1477 = vpack.c.b16 %v1466, %v1465
        %v1478 = vpack.c.b16 %v1468, %v1467
        %v1479 = vpack.c.b16 %v1470, %v1469
        %v1480 = vpack.c.b16 %v1472, %v1471
        %1489 = vmatprep.subr.bf16.mxu0 0
        %1490 = vmatpush1.bf16.msra.mxu0 %v1473
        %1491 = vmatprep.subr.bf16.mxu0 0
        %1492 = vmatpush1.bf16.msra.mxu0 %v1474
        %1493 = vmatprep.subr.bf16.mxu0 0
        %1494 = vmatpush1.bf16.msra.mxu0 %v1475
        %1495 = vmatprep.subr.bf16.mxu0 0
        %1496 = vmatpush1.bf16.msra.mxu0 %v1476
        %1497 = vmatprep.subr.bf16.mxu0 0
        %1498 = vmatpush1.bf16.msra.mxu0 %v1477
        %1499 = vmatprep.subr.bf16.mxu0 0
        %1500 = vmatpush1.bf16.msra.mxu0 %v1478
        %1501 = vmatprep.subr.bf16.mxu0 0
        %1502 = vmatpush1.bf16.msra.mxu0 %v1479
        %1503 = vmatprep.subr.bf16.mxu0 0
        %1504 = vmatpush1.bf16.msra.mxu0 %v1480
        %1505 = vmatprep.subr.bf16.mxu0 0
        %1506 = vmatpush1.bf16.msra.mxu0 0
        %1507 = vmatprep.subr.bf16.mxu0 0
        %1508 = vmatpush1.bf16.msra.mxu0 0
        %1509 = vmatprep.subr.bf16.mxu0 0
        %1510 = vmatpush1.bf16.msra.mxu0 0
        %1511 = vmatprep.subr.bf16.mxu0 0
        %1512 = vmatpush1.bf16.msra.mxu0 0
        %1513 = vmatprep.subr.bf16.mxu0 0
        %1514 = vmatpush1.bf16.msra.mxu0 0
        %1515 = vmatprep.subr.bf16.mxu0 0
        %1516 = vmatpush1.bf16.msra.mxu0 0
        %1517 = vmatprep.subr.bf16.mxu0 0
        %1518 = vmatpush1.bf16.msra.mxu0 0
        %1519 = vmatprep.subr.bf16.mxu0 0
        %1520 = vmatpush1.bf16.msra.mxu0 0
        %1521 = vmatprep.mubr.bf16.mxu0 0
        %1522 = vmatmul.mubr.bf16.gmra.mrb[0].mxu0 %v1424
        %v1523 = vpop.f32.mrb[0].mxu0
        %v1524 = vadd.f32 0.0, %v1523
        %v1525 = vpop.f32.mrb[0].mxu0
        %v1526 = vpop.f32.mrb[0].mxu0
        %v1527 = vpop.f32.mrb[0].mxu0
        %1528 = vdwg.mxu0
        %v1529 = vadd.f32 %v1423, %v1524
        %v1530 = vld [vmem:[%s10] sm:$0x1]
        %v1531 = vld [vmem:[%s11] sm:$0x1]
        %1532 = vadd.xlane.f32.xlu0 %v1529
        %v1533 = vpop.xlane.xlu0 %1532
        %v1534 = vmul.f32 %v1533, %v657
        %v1535 = vsub.f32 %v1529, %v1534
        %v1536 = vmul.f32 %v1535, %v1535
        %1537 = vadd.xlane.f32.xlu0 %v1536
        %v1538 = vpop.xlane.xlu0 %1537
        %v1539 = vmul.f32 %v1538, %v657
        %v1540 = vadd.f32 %v1539, 1e-05
        %v1541 = vrsqrt.pop %v1540
        %v1542 = vmul.f32 %v1535, %v1541
        %v1544 = vlaneseq
        %v1545 = vshrl.u32 %v1544, 7
        %v1546 = vsub.s32 0, %v1545
        %v1547 = vrot.slane %v1530, %v1546
        %v1549 = vmul.f32 %v1542, %v1547
        %v1551 = vlaneseq
        %v1552 = vshrl.u32 %v1551, 7
        %v1553 = vsub.s32 0, %v1552
        %v1554 = vrot.slane %v1531, %v1553
        %v1556 = vadd.f32 %v1549, %v1554
        %v1557 = vpack.c.bf16 %v1556, %v1556
        %v1558 = vld [vmem:[#allocation11] sm:$0xff]
        %v1559 = vld [vmem:[#allocation11 + $0x8] sm:$0xff]
        %v1560 = vld [vmem:[#allocation11 + $0x10] sm:$0xff]
        %v1561 = vld [vmem:[#allocation11 + $0x18] sm:$0xff]
        %v1562 = vld [vmem:[#allocation11 + $0x20] sm:$0xff]
        %v1563 = vld [vmem:[#allocation11 + $0x28] sm:$0xff]
        %v1564 = vld [vmem:[#allocation11 + $0x30] sm:$0xff]
        %v1565 = vld [vmem:[#allocation11 + $0x38] sm:$0xff]
        %v1566 = vld [vmem:[#allocation11 + $0x40] sm:$0xff]
        %v1567 = vld [vmem:[#allocation11 + $0x48] sm:$0xff]
        %v1568 = vld [vmem:[#allocation11 + $0x50] sm:$0xff]
        %v1569 = vld [vmem:[#allocation11 + $0x58] sm:$0xff]
        %v1570 = vld [vmem:[#allocation11 + $0x60] sm:$0xff]
        %v1571 = vld [vmem:[#allocation11 + $0x68] sm:$0xff]
        %v1572 = vld [vmem:[#allocation11 + $0x70] sm:$0xff]
        %v1573 = vld [vmem:[#allocation11 + $0x78] sm:$0xff]
        %v1574 = vld [vmem:[#allocation11 + $0x80] sm:$0xff]
        %v1575 = vld [vmem:[#allocation11 + $0x88] sm:$0xff]
        %v1576 = vld [vmem:[#allocation11 + $0x90] sm:$0xff]
        %v1577 = vld [vmem:[#allocation11 + $0x98] sm:$0xff]
        %v1578 = vld [vmem:[#allocation11 + $0xa0] sm:$0xff]
        %v1579 = vld [vmem:[#allocation11 + $0xa8] sm:$0xff]
        %v1580 = vld [vmem:[#allocation11 + $0xb0] sm:$0xff]
        %v1581 = vld [vmem:[#allocation11 + $0xb8] sm:$0xff]
        %v1582 = vld [vmem:[#allocation11 + $0xc0] sm:$0xff]
        %v1583 = vld [vmem:[#allocation11 + $0xc8] sm:$0xff]
        %v1584 = vld [vmem:[#allocation11 + $0xd0] sm:$0xff]
        %v1585 = vld [vmem:[#allocation11 + $0xd8] sm:$0xff]
        %v1586 = vld [vmem:[#allocation11 + $0xe0] sm:$0xff]
        %v1587 = vld [vmem:[#allocation11 + $0xe8] sm:$0xff]
        %v1588 = vld [vmem:[#allocation11 + $0xf0] sm:$0xff]
        %v1589 = vld [vmem:[#allocation11 + $0xf8] sm:$0xff]
        %v1590 = vld [vmem:[%s13] sm:$0xf]
        %v1592 = vlaneseq
        %v1593 = vshrl.u32 %v1592, 7
        %v1594 = vsub.s32 0, %v1593
        %v1595 = vrot.slane %v1590, %v1594
        %v1596 = vlaneseq
        %v1597 = vshrl.u32 %v1596, 7
        %v1598 = vsub.s32 1, %v1597
        %v1599 = vrot.slane %v1590, %v1598
        %v1600 = vlaneseq
        %v1601 = vshrl.u32 %v1600, 7
        %v1602 = vsub.s32 2, %v1601
        %v1603 = vrot.slane %v1590, %v1602
        %v1604 = vlaneseq
        %v1605 = vshrl.u32 %v1604, 7
        %v1606 = vsub.s32 3, %v1605
        %v1607 = vrot.slane %v1590, %v1606
        %v1644 = vunpack.c.l.b16 %v1558
        %v1645 = vunpack.c.h.b16 %v1558
        %v1646 = vunpack.c.l.b16 %v1559
        %v1647 = vunpack.c.h.b16 %v1559
        %v1648 = vunpack.c.l.b16 %v1560
        %v1649 = vunpack.c.h.b16 %v1560
        %v1650 = vunpack.c.l.b16 %v1561
        %v1651 = vunpack.c.h.b16 %v1561
        %v1652 = vunpack.c.l.b16 %v1562
        %v1653 = vunpack.c.h.b16 %v1562
        %v1654 = vunpack.c.l.b16 %v1563
        %v1655 = vunpack.c.h.b16 %v1563
        %v1656 = vunpack.c.l.b16 %v1564
        %v1657 = vunpack.c.h.b16 %v1564
        %v1658 = vunpack.c.l.b16 %v1565
        %v1659 = vunpack.c.h.b16 %v1565
        %v1660 = vunpack.c.l.b16 %v1566
        %v1661 = vunpack.c.h.b16 %v1566
        %v1662 = vunpack.c.l.b16 %v1567
        %v1663 = vunpack.c.h.b16 %v1567
        %v1664 = vunpack.c.l.b16 %v1568
        %v1665 = vunpack.c.h.b16 %v1568
        %v1666 = vunpack.c.l.b16 %v1569
        %v1667 = vunpack.c.h.b16 %v1569
        %v1668 = vunpack.c.l.b16 %v1570
        %v1669 = vunpack.c.h.b16 %v1570
        %v1670 = vunpack.c.l.b16 %v1571
        %v1671 = vunpack.c.h.b16 %v1571
        %v1672 = vunpack.c.l.b16 %v1572
        %v1673 = vunpack.c.h.b16 %v1572
        %v1674 = vunpack.c.l.b16 %v1573
        %v1675 = vunpack.c.h.b16 %v1573
        %v1676 = vunpack.c.l.b16 %v1574
        %v1677 = vunpack.c.h.b16 %v1574
        %v1678 = vunpack.c.l.b16 %v1575
        %v1679 = vunpack.c.h.b16 %v1575
        %v1680 = vunpack.c.l.b16 %v1576
        %v1681 = vunpack.c.h.b16 %v1576
        %v1682 = vunpack.c.l.b16 %v1577
        %v1683 = vunpack.c.h.b16 %v1577
        %v1684 = vunpack.c.l.b16 %v1578
        %v1685 = vunpack.c.h.b16 %v1578
        %v1686 = vunpack.c.l.b16 %v1579
        %v1687 = vunpack.c.h.b16 %v1579
        %v1688 = vunpack.c.l.b16 %v1580
        %v1689 = vunpack.c.h.b16 %v1580
        %v1690 = vunpack.c.l.b16 %v1581
        %v1691 = vunpack.c.h.b16 %v1581
        %v1692 = vunpack.c.l.b16 %v1582
        %v1693 = vunpack.c.h.b16 %v1582
        %v1694 = vunpack.c.l.b16 %v1583
        %v1695 = vunpack.c.h.b16 %v1583
        %v1696 = vunpack.c.l.b16 %v1584
        %v1697 = vunpack.c.h.b16 %v1584
        %v1698 = vunpack.c.l.b16 %v1585
        %v1699 = vunpack.c.h.b16 %v1585
        %v1700 = vunpack.c.l.b16 %v1586
        %v1701 = vunpack.c.h.b16 %v1586
        %v1702 = vunpack.c.l.b16 %v1587
        %v1703 = vunpack.c.h.b16 %v1587
        %v1704 = vunpack.c.l.b16 %v1588
        %v1705 = vunpack.c.h.b16 %v1588
        %v1706 = vunpack.c.l.b16 %v1589
        %v1707 = vunpack.c.h.b16 %v1589
        %v1708 = vpack.c.b16 %v1648, %v1644
        %v1709 = vpack.c.b16 %v1649, %v1645
        %v1710 = vpack.c.b16 %v1650, %v1646
        %v1711 = vpack.c.b16 %v1651, %v1647
        %v1712 = vpack.c.b16 %v1656, %v1652
        %v1713 = vpack.c.b16 %v1657, %v1653
        %v1714 = vpack.c.b16 %v1658, %v1654
        %v1715 = vpack.c.b16 %v1659, %v1655
        %v1716 = vpack.c.b16 %v1664, %v1660
        %v1717 = vpack.c.b16 %v1665, %v1661
        %v1718 = vpack.c.b16 %v1666, %v1662
        %v1719 = vpack.c.b16 %v1667, %v1663
        %v1720 = vpack.c.b16 %v1672, %v1668
        %v1721 = vpack.c.b16 %v1673, %v1669
        %v1722 = vpack.c.b16 %v1674, %v1670
        %v1723 = vpack.c.b16 %v1675, %v1671
        %v1724 = vpack.c.b16 %v1680, %v1676
        %v1725 = vpack.c.b16 %v1681, %v1677
        %v1726 = vpack.c.b16 %v1682, %v1678
        %v1727 = vpack.c.b16 %v1683, %v1679
        %v1728 = vpack.c.b16 %v1688, %v1684
        %v1729 = vpack.c.b16 %v1689, %v1685
        %v1730 = vpack.c.b16 %v1690, %v1686
        %v1731 = vpack.c.b16 %v1691, %v1687
        %v1732 = vpack.c.b16 %v1696, %v1692
        %v1733 = vpack.c.b16 %v1697, %v1693
        %v1734 = vpack.c.b16 %v1698, %v1694
        %v1735 = vpack.c.b16 %v1699, %v1695
        %v1736 = vpack.c.b16 %v1704, %v1700
        %v1737 = vpack.c.b16 %v1705, %v1701
        %v1738 = vpack.c.b16 %v1706, %v1702
        %v1739 = vpack.c.b16 %v1707, %v1703
        %1772 = vmatprep.subr.bf16.mxu0 %v1709
        %1773 = vmatpush1.bf16.msra.mxu0 %v1708
        %1774 = vmatprep.subr.bf16.mxu0 %v1713
        %1775 = vmatpush1.bf16.msra.mxu0 %v1712
        %1776 = vmatprep.subr.bf16.mxu0 %v1717
        %1777 = vmatpush1.bf16.msra.mxu0 %v1716
        %1778 = vmatprep.subr.bf16.mxu0 %v1721
        %1779 = vmatpush1.bf16.msra.mxu0 %v1720
        %1780 = vmatprep.subr.bf16.mxu0 %v1725
        %1781 = vmatpush1.bf16.msra.mxu0 %v1724
        %1782 = vmatprep.subr.bf16.mxu0 %v1729
        %1783 = vmatpush1.bf16.msra.mxu0 %v1728
        %1784 = vmatprep.subr.bf16.mxu0 %v1733
        %1785 = vmatpush1.bf16.msra.mxu0 %v1732
        %1786 = vmatprep.subr.bf16.mxu0 %v1737
        %1787 = vmatpush1.bf16.msra.mxu0 %v1736
        %1788 = vmatprep.subr.bf16.mxu0 0
        %1789 = vmatpush1.bf16.msra.mxu0 0
        %1790 = vmatprep.subr.bf16.mxu0 0
        %1791 = vmatpush1.bf16.msra.mxu0 0
        %1792 = vmatprep.subr.bf16.mxu0 0
        %1793 = vmatpush1.bf16.msra.mxu0 0
        %1794 = vmatprep.subr.bf16.mxu0 0
        %1795 = vmatpush1.bf16.msra.mxu0 0
        %1796 = vmatprep.subr.bf16.mxu0 0
        %1797 = vmatpush1.bf16.msra.mxu0 0
        %1798 = vmatprep.subr.bf16.mxu0 0
        %1799 = vmatpush1.bf16.msra.mxu0 0
        %1800 = vmatprep.subr.bf16.mxu0 0
        %1801 = vmatpush1.bf16.msra.mxu0 0
        %1802 = vmatprep.subr.bf16.mxu0 0
        %1803 = vmatpush1.bf16.msra.mxu0 0
        %1804 = vmatprep.mubr.bf16.mxu0 0
        %1805 = vmatmul.mubr.bf16.gmra.mrb[0].mxu0 %v1557
        %v1806 = vpop.f32.mrb[0].mxu0
        %v1807 = vadd.f32 %v1595, %v1806
        %v1808 = vpop.f32.mrb[0].mxu0
        %v1809 = vadd.f32 %v1599, %v1808
        %v1810 = vpop.f32.mrb[0].mxu0
        %v1811 = vpop.f32.mrb[0].mxu0
        %1812 = vdwg.mxu0
        %1813 = vmatprep.subr.bf16.mxu0 %v1711
        %1814 = vmatpush1.bf16.msra.mxu0 %v1710
        %1815 = vmatprep.subr.bf16.mxu0 %v1715
        %1816 = vmatpush1.bf16.msra.mxu0 %v1714
        %1817 = vmatprep.subr.bf16.mxu0 %v1719
        %1818 = vmatpush1.bf16.msra.mxu0 %v1718
        %1819 = vmatprep.subr.bf16.mxu0 %v1723
        %1820 = vmatpush1.bf16.msra.mxu0 %v1722
        %1821 = vmatprep.subr.bf16.mxu0 %v1727
        %1822 = vmatpush1.bf16.msra.mxu0 %v1726
        %1823 = vmatprep.subr.bf16.mxu0 %v1731
        %1824 = vmatpush1.bf16.msra.mxu0 %v1730
        %1825 = vmatprep.subr.bf16.mxu0 %v1735
        %1826 = vmatpush1.bf16.msra.mxu0 %v1734
        %1827 = vmatprep.subr.bf16.mxu0 %v1739
        %1828 = vmatpush1.bf16.msra.mxu0 %v1738
        %1829 = vmatprep.subr.bf16.mxu0 0
        %1830 = vmatpush1.bf16.msra.mxu0 0
        %1831 = vmatprep.subr.bf16.mxu0 0
        %1832 = vmatpush1.bf16.msra.mxu0 0
        %1833 = vmatprep.subr.bf16.mxu0 0
        %1834 = vmatpush1.bf16.msra.mxu0 0
        %1835 = vmatprep.subr.bf16.mxu0 0
        %1836 = vmatpush1.bf16.msra.mxu0 0
        %1837 = vmatprep.subr.bf16.mxu0 0
        %1838 = vmatpush1.bf16.msra.mxu0 0
        %1839 = vmatprep.subr.bf16.mxu0 0
        %1840 = vmatpush1.bf16.msra.mxu0 0
        %1841 = vmatprep.subr.bf16.mxu0 0
        %1842 = vmatpush1.bf16.msra.mxu0 0
        %1843 = vmatprep.subr.bf16.mxu0 0
        %1844 = vmatpush1.bf16.msra.mxu0 0
        %1845 = vmatprep.mubr.bf16.mxu0 0
        %1846 = vmatmul.mubr.bf16.gmra.mrb[0].mxu0 %v1557
        %v1847 = vpop.f32.mrb[0].mxu0
        %v1848 = vadd.f32 %v1603, %v1847
        %v1849 = vpop.f32.mrb[0].mxu0
        %v1850 = vadd.f32 %v1607, %v1849
        %v1851 = vpop.f32.mrb[0].mxu0
        %v1852 = vpop.f32.mrb[0].mxu0
        %1853 = vdwg.mxu0
        %v1854 = vmul.f32 %v1807, 0.5
        %v1855 = vmul.f32 %v1809, 0.5
        %v1856 = vmul.f32 %v1848, 0.5
        %v1857 = vmul.f32 %v1850, 0.5
        %v1858 = vmul.f32 %v1807, 0.044715
        %v1859 = vmul.f32 %v1809, 0.044715
        %v1860 = vmul.f32 %v1848, 0.044715
        %v1861 = vmul.f32 %v1850, 0.044715
        %v1862 = vmul.f32 %v1858, %v1807
        %v1863 = vmul.f32 %v1859, %v1809
        %v1864 = vmul.f32 %v1860, %v1848
        %v1865 = vmul.f32 %v1861, %v1850
        %v1866 = vmul.f32 %v1862, %v1807
        %v1867 = vmul.f32 %v1863, %v1809
        %v1868 = vmul.f32 %v1864, %v1848
        %v1869 = vmul.f32 %v1865, %v1850
        %v1870 = vadd.f32 %v1807, %v1866
        %v1871 = vadd.f32 %v1809, %v1867
        %v1872 = vadd.f32 %v1848, %v1868
        %v1873 = vadd.f32 %v1850, %v1869
        %v1874 = vmul.f32 %v1870, 0.7978846
        %v1875 = vmul.f32 %v1871, 0.7978846
        %v1876 = vmul.f32 %v1872, 0.7978846
        %v1877 = vmul.f32 %v1873, 0.7978846
        %v1878 = vtanh.pop %v1874
        %v1879 = vtanh.pop %v1875
        %v1880 = vtanh.pop %v1876
        %v1881 = vtanh.pop %v1877
        %v1882 = vadd.f32 %v1878, 1.0
        %v1883 = vadd.f32 %v1879, 1.0
        %v1884 = vadd.f32 %v1880, 1.0
        %v1885 = vadd.f32 %v1881, 1.0
        %v1886 = vmul.f32 %v1854, %v1882
        %v1887 = vmul.f32 %v1855, %v1883
        %v1888 = vmul.f32 %v1856, %v1884
        %v1889 = vmul.f32 %v1857, %v1885
        %v1890 = vpack.c.bf16 %v1886, %v1886
        %v1891 = vpack.c.bf16 %v1887, %v1887
        %v1892 = vpack.c.bf16 %v1888, %v1888
        %v1893 = vpack.c.bf16 %v1889, %v1889
        %v1894 = vld [vmem:[#allocation13] sm:$0xf]
        %v1895 = vld [vmem:[#allocation13 + $0x4] sm:$0xf]
        %v1896 = vld [vmem:[#allocation13 + $0x8] sm:$0xf]
        %v1897 = vld [vmem:[#allocation13 + $0xc] sm:$0xf]
        %v1898 = vld [vmem:[#allocation13 + $0x10] sm:$0xf]
        %v1899 = vld [vmem:[#allocation13 + $0x14] sm:$0xf]
        %v1900 = vld [vmem:[#allocation13 + $0x18] sm:$0xf]
        %v1901 = vld [vmem:[#allocation13 + $0x1c] sm:$0xf]
        %v1902 = vld [vmem:[#allocation13 + $0x20] sm:$0xf]
        %v1903 = vld [vmem:[#allocation13 + $0x24] sm:$0xf]
        %v1904 = vld [vmem:[#allocation13 + $0x28] sm:$0xf]
        %v1905 = vld [vmem:[#allocation13 + $0x2c] sm:$0xf]
        %v1906 = vld [vmem:[#allocation13 + $0x30] sm:$0xf]
        %v1907 = vld [vmem:[#allocation13 + $0x34] sm:$0xf]
        %v1908 = vld [vmem:[#allocation13 + $0x38] sm:$0xf]
        %v1909 = vld [vmem:[#allocation13 + $0x3c] sm:$0xf]
        %v1910 = vld [vmem:[#allocation13 + $0x40] sm:$0xf]
        %v1911 = vld [vmem:[#allocation13 + $0x44] sm:$0xf]
        %v1912 = vld [vmem:[#allocation13 + $0x48] sm:$0xf]
        %v1913 = vld [vmem:[#allocation13 + $0x4c] sm:$0xf]
        %v1914 = vld [vmem:[#allocation13 + $0x50] sm:$0xf]
        %v1915 = vld [vmem:[#allocation13 + $0x54] sm:$0xf]
        %v1916 = vld [vmem:[#allocation13 + $0x58] sm:$0xf]
        %v1917 = vld [vmem:[#allocation13 + $0x5c] sm:$0xf]
        %v1918 = vld [vmem:[#allocation13 + $0x60] sm:$0xf]
        %v1919 = vld [vmem:[#allocation13 + $0x64] sm:$0xf]
        %v1920 = vld [vmem:[#allocation13 + $0x68] sm:$0xf]
        %v1921 = vld [vmem:[#allocation13 + $0x6c] sm:$0xf]
        %v1922 = vld [vmem:[#allocation13 + $0x70] sm:$0xf]
        %v1923 = vld [vmem:[#allocation13 + $0x74] sm:$0xf]
        %v1924 = vld [vmem:[#allocation13 + $0x78] sm:$0xf]
        %v1925 = vld [vmem:[#allocation13 + $0x7c] sm:$0xf]
        %v1926 = vld [vmem:[#allocation13 + $0x80] sm:$0xf]
        %v1927 = vld [vmem:[#allocation13 + $0x84] sm:$0xf]
        %v1928 = vld [vmem:[#allocation13 + $0x88] sm:$0xf]
        %v1929 = vld [vmem:[#allocation13 + $0x8c] sm:$0xf]
        %v1930 = vld [vmem:[#allocation13 + $0x90] sm:$0xf]
        %v1931 = vld [vmem:[#allocation13 + $0x94] sm:$0xf]
        %v1932 = vld [vmem:[#allocation13 + $0x98] sm:$0xf]
        %v1933 = vld [vmem:[#allocation13 + $0x9c] sm:$0xf]
        %v1934 = vld [vmem:[#allocation13 + $0xa0] sm:$0xf]
        %v1935 = vld [vmem:[#allocation13 + $0xa4] sm:$0xf]
        %v1936 = vld [vmem:[#allocation13 + $0xa8] sm:$0xf]
        %v1937 = vld [vmem:[#allocation13 + $0xac] sm:$0xf]
        %v1938 = vld [vmem:[#allocation13 + $0xb0] sm:$0xf]
        %v1939 = vld [vmem:[#allocation13 + $0xb4] sm:$0xf]
        %v1940 = vld [vmem:[#allocation13 + $0xb8] sm:$0xf]
        %v1941 = vld [vmem:[#allocation13 + $0xbc] sm:$0xf]
        %v1942 = vld [vmem:[#allocation13 + $0xc0] sm:$0xf]
        %v1943 = vld [vmem:[#allocation13 + $0xc4] sm:$0xf]
        %v1944 = vld [vmem:[#allocation13 + $0xc8] sm:$0xf]
        %v1945 = vld [vmem:[#allocation13 + $0xcc] sm:$0xf]
        %v1946 = vld [vmem:[#allocation13 + $0xd0] sm:$0xf]
        %v1947 = vld [vmem:[#allocation13 + $0xd4] sm:$0xf]
        %v1948 = vld [vmem:[#allocation13 + $0xd8] sm:$0xf]
        %v1949 = vld [vmem:[#allocation13 + $0xdc] sm:$0xf]
        %v1950 = vld [vmem:[#allocation13 + $0xe0] sm:$0xf]
        %v1951 = vld [vmem:[#allocation13 + $0xe4] sm:$0xf]
        %v1952 = vld [vmem:[#allocation13 + $0xe8] sm:$0xf]
        %v1953 = vld [vmem:[#allocation13 + $0xec] sm:$0xf]
        %v1954 = vld [vmem:[#allocation13 + $0xf0] sm:$0xf]
        %v1955 = vld [vmem:[#allocation13 + $0xf4] sm:$0xf]
        %v1956 = vld [vmem:[#allocation13 + $0xf8] sm:$0xf]
        %v1957 = vld [vmem:[#allocation13 + $0xfc] sm:$0xf]
        %v1958 = vld [vmem:[%s15] sm:$0x1]
        %v1960 = vlaneseq
        %v1961 = vshrl.u32 %v1960, 7
        %v1962 = vsub.s32 0, %v1961
        %v1963 = vrot.slane %v1958, %v1962
        %v2029 = vunpack.c.l.b16 %v1894
        %v2030 = vunpack.c.l.b16 %v1895
        %v2031 = vunpack.c.l.b16 %v1896
        %v2032 = vunpack.c.l.b16 %v1897
        %v2033 = vunpack.c.l.b16 %v1898
        %v2034 = vunpack.c.l.b16 %v1899
        %v2035 = vunpack.c.l.b16 %v1900
        %v2036 = vunpack.c.l.b16 %v1901
        %v2037 = vunpack.c.l.b16 %v1902
        %v2038 = vunpack.c.l.b16 %v1903
        %v2039 = vunpack.c.l.b16 %v1904
        %v2040 = vunpack.c.l.b16 %v1905
        %v2041 = vunpack.c.l.b16 %v1906
        %v2042 = vunpack.c.l.b16 %v1907
        %v2043 = vunpack.c.l.b16 %v1908
        %v2044 = vunpack.c.l.b16 %v1909
        %v2045 = vunpack.c.l.b16 %v1910
        %v2046 = vunpack.c.l.b16 %v1911
        %v2047 = vunpack.c.l.b16 %v1912
        %v2048 = vunpack.c.l.b16 %v1913
        %v2049 = vunpack.c.l.b16 %v1914
        %v2050 = vunpack.c.l.b16 %v1915
        %v2051 = vunpack.c.l.b16 %v1916
        %v2052 = vunpack.c.l.b16 %v1917
        %v2053 = vunpack.c.l.b16 %v1918
        %v2054 = vunpack.c.l.b16 %v1919
        %v2055 = vunpack.c.l.b16 %v1920
        %v2056 = vunpack.c.l.b16 %v1921
        %v2057 = vunpack.c.l.b16 %v1922
        %v2058 = vunpack.c.l.b16 %v1923
        %v2059 = vunpack.c.l.b16 %v1924
        %v2060 = vunpack.c.l.b16 %v1925
        %v2061 = vunpack.c.l.b16 %v1926
        %v2062 = vunpack.c.l.b16 %v1927
        %v2063 = vunpack.c.l.b16 %v1928
        %v2064 = vunpack.c.l.b16 %v1929
        %v2065 = vunpack.c.l.b16 %v1930
        %v2066 = vunpack.c.l.b16 %v1931
        %v2067 = vunpack.c.l.b16 %v1932
        %v2068 = vunpack.c.l.b16 %v1933
        %v2069 = vunpack.c.l.b16 %v1934
        %v2070 = vunpack.c.l.b16 %v1935
        %v2071 = vunpack.c.l.b16 %v1936
        %v2072 = vunpack.c.l.b16 %v1937
        %v2073 = vunpack.c.l.b16 %v1938
        %v2074 = vunpack.c.l.b16 %v1939
        %v2075 = vunpack.c.l.b16 %v1940
        %v2076 = vunpack.c.l.b16 %v1941
        %v2077 = vunpack.c.l.b16 %v1942
        %v2078 = vunpack.c.l.b16 %v1943
        %v2079 = vunpack.c.l.b16 %v1944
        %v2080 = vunpack.c.l.b16 %v1945
        %v2081 = vunpack.c.l.b16 %v1946
        %v2082 = vunpack.c.l.b16 %v1947
        %v2083 = vunpack.c.l.b16 %v1948
        %v2084 = vunpack.c.l.b16 %v1949
        %v2085 = vunpack.c.l.b16 %v1950
        %v2086 = vunpack.c.l.b16 %v1951
        %v2087 = vunpack.c.l.b16 %v1952
        %v2088 = vunpack.c.l.b16 %v1953
        %v2089 = vunpack.c.l.b16 %v1954
        %v2090 = vunpack.c.l.b16 %v1955
        %v2091 = vunpack.c.l.b16 %v1956
        %v2092 = vunpack.c.l.b16 %v1957
        %v2093 = vpack.c.b16 %v2030, %v2029
        %v2094 = vpack.c.b16 %v2032, %v2031
        %v2095 = vpack.c.b16 %v2034, %v2033
        %v2096 = vpack.c.b16 %v2036, %v2035
        %v2097 = vpack.c.b16 %v2038, %v2037
        %v2098 = vpack.c.b16 %v2040, %v2039
        %v2099 = vpack.c.b16 %v2042, %v2041
        %v2100 = vpack.c.b16 %v2044, %v2043
        %v2101 = vpack.c.b16 %v2046, %v2045
        %v2102 = vpack.c.b16 %v2048, %v2047
        %v2103 = vpack.c.b16 %v2050, %v2049
        %v2104 = vpack.c.b16 %v2052, %v2051
        %v2105 = vpack.c.b16 %v2054, %v2053
        %v2106 = vpack.c.b16 %v2056, %v2055
        %v2107 = vpack.c.b16 %v2058, %v2057
        %v2108 = vpack.c.b16 %v2060, %v2059
        %v2109 = vpack.c.b16 %v2062, %v2061
        %v2110 = vpack.c.b16 %v2064, %v2063
        %v2111 = vpack.c.b16 %v2066, %v2065
        %v2112 = vpack.c.b16 %v2068, %v2067
        %v2113 = vpack.c.b16 %v2070, %v2069
        %v2114 = vpack.c.b16 %v2072, %v2071
        %v2115 = vpack.c.b16 %v2074, %v2073
        %v2116 = vpack.c.b16 %v2076, %v2075
        %v2117 = vpack.c.b16 %v2078, %v2077
        %v2118 = vpack.c.b16 %v2080, %v2079
        %v2119 = vpack.c.b16 %v2082, %v2081
        %v2120 = vpack.c.b16 %v2084, %v2083
        %v2121 = vpack.c.b16 %v2086, %v2085
        %v2122 = vpack.c.b16 %v2088, %v2087
        %v2123 = vpack.c.b16 %v2090, %v2089
        %v2124 = vpack.c.b16 %v2092, %v2091
        %2157 = vmatprep.subr.bf16.mxu0 0
        %2158 = vmatpush1.bf16.msra.mxu0 %v2093
        %2159 = vmatprep.subr.bf16.mxu0 0
        %2160 = vmatpush1.bf16.msra.mxu0 %v2094
        %2161 = vmatprep.subr.bf16.mxu0 0
        %2162 = vmatpush1.bf16.msra.mxu0 %v2095
        %2163 = vmatprep.subr.bf16.mxu0 0
        %2164 = vmatpush1.bf16.msra.mxu0 %v2096
        %2165 = vmatprep.subr.bf16.mxu0 0
        %2166 = vmatpush1.bf16.msra.mxu0 %v2097
        %2167 = vmatprep.subr.bf16.mxu0 0
        %2168 = vmatpush1.bf16.msra.mxu0 %v2098
        %2169 = vmatprep.subr.bf16.mxu0 0
        %2170 = vmatpush1.bf16.msra.mxu0 %v2099
        %2171 = vmatprep.subr.bf16.mxu0 0
        %2172 = vmatpush1.bf16.msra.mxu0 %v2100
        %2173 = vmatprep.subr.bf16.mxu0 0
        %2174 = vmatpush1.bf16.msra.mxu0 %v2101
        %2175 = vmatprep.subr.bf16.mxu0 0
        %2176 = vmatpush1.bf16.msra.mxu0 %v2102
        %2177 = vmatprep.subr.bf16.mxu0 0
        %2178 = vmatpush1.bf16.msra.mxu0 %v2103
        %2179 = vmatprep.subr.bf16.mxu0 0
        %2180 = vmatpush1.bf16.msra.mxu0 %v2104
        %2181 = vmatprep.subr.bf16.mxu0 0
        %2182 = vmatpush1.bf16.msra.mxu0 %v2105
        %2183 = vmatprep.subr.bf16.mxu0 0
        %2184 = vmatpush1.bf16.msra.mxu0 %v2106
        %2185 = vmatprep.subr.bf16.mxu0 0
        %2186 = vmatpush1.bf16.msra.mxu0 %v2107
        %2187 = vmatprep.subr.bf16.mxu0 0
        %2188 = vmatpush1.bf16.msra.mxu0 %v2108
        %2189 = vmatprep.mubr.bf16.mxu0 %v1891
        %2190 = vmatmul.mubr.bf16.gmra.mrb[0].mxu0 %v1890
        %v2191 = vpop.f32.mrb[0].mxu0
        %v2192 = vadd.f32 %v1963, %v2191
        %v2193 = vpop.f32.mrb[0].mxu0
        %v2194 = vpop.f32.mrb[0].mxu0
        %v2195 = vpop.f32.mrb[0].mxu0
        %2196 = vdwg.mxu0
        %2197 = vmatprep.subr.bf16.mxu0 0
        %2198 = vmatpush1.bf16.msra.mxu0 %v2109
        %2199 = vmatprep.subr.bf16.mxu0 0
        %2200 = vmatpush1.bf16.msra.mxu0 %v2110
        %2201 = vmatprep.subr.bf16.mxu0 0
        %2202 = vmatpush1.bf16.msra.mxu0 %v2111
        %2203 = vmatprep.subr.bf16.mxu0 0
        %2204 = vmatpush1.bf16.msra.mxu0 %v2112
        %2205 = vmatprep.subr.bf16.mxu0 0
        %2206 = vmatpush1.bf16.msra.mxu0 %v2113
        %2207 = vmatprep.subr.bf16.mxu0 0
        %2208 = vmatpush1.bf16.msra.mxu0 %v2114
        %2209 = vmatprep.subr.bf16.mxu0 0
        %2210 = vmatpush1.bf16.msra.mxu0 %v2115
        %2211 = vmatprep.subr.bf16.mxu0 0
        %2212 = vmatpush1.bf16.msra.mxu0 %v2116
        %2213 = vmatprep.subr.bf16.mxu0 0
        %2214 = vmatpush1.bf16.msra.mxu0 %v2117
        %2215 = vmatprep.subr.bf16.mxu0 0
        %2216 = vmatpush1.bf16.msra.mxu0 %v2118
        %2217 = vmatprep.subr.bf16.mxu0 0
        %2218 = vmatpush1.bf16.msra.mxu0 %v2119
        %2219 = vmatprep.subr.bf16.mxu0 0
        %2220 = vmatpush1.bf16.msra.mxu0 %v2120
        %2221 = vmatprep.subr.bf16.mxu0 0
        %2222 = vmatpush1.bf16.msra.mxu0 %v2121
        %2223 = vmatprep.subr.bf16.mxu0 0
        %2224 = vmatpush1.bf16.msra.mxu0 %v2122
        %2225 = vmatprep.subr.bf16.mxu0 0
        %2226 = vmatpush1.bf16.msra.mxu0 %v2123
        %2227 = vmatprep.subr.bf16.mxu0 0
        %2228 = vmatpush1.bf16.msra.mxu0 %v2124
        %2229 = vmatprep.mubr.bf16.mxu0 %v1893
        %2230 = vmatmul.mubr.bf16.gmra.mrb[0].mxu0 %v1892
        %v2231 = vpop.f32.mrb[0].mxu0
        %v2232 = vadd.f32 %v2192, %v2231
        %v2233 = vpop.f32.mrb[0].mxu0
        %v2234 = vpop.f32.mrb[0].mxu0
        %v2235 = vpop.f32.mrb[0].mxu0
        %2236 = vdwg.mxu0
        %v2237 = vadd.f32 %v1529, %v2232
        %2238 = vst [vmem:[%s648] sm:$0xff] %v2237
        %s2239 = sand.u32 %s392, 1
        %s2240 = scalar_lea.sflag [#allocation4], %s2239
        %s2241 = sand.u32 %s392, 1
        %s2242 = smul.addr %s2241, 8
        %s2243 = scalar_lea.vmem [#allocation14], %s2242
        // Predicated region
        $region113: #{tpu_custom_call.1} parent=83 // pred_check
          %p2244 = pneg %p402
        $region114: #{tpu_custom_call.1} parent=83 // pred_check_branch
          %2246 = sbr.rel (%p2244) target = $region116
        $region115: #{tpu_custom_call.1} parent=83 // pred_region
          %s2248 = ssub.s32 128, 128
          %2249 = vsyncadd %s2240, %s2248
          %s2250 = smul.addr %s38, 128
          %s2251 = scalar_lea.hbm %s16, %s2250
          %s2253 = sshll.u32 %s2243, 4
          %s2254 = int_to_ptr.vmem [resolvable:$true] %s2253
          %2256 = dma.vmem_to_hbm [thread:$0]  %s2254, 128, %s2251, %s2240
        $region116: #{tpu_custom_call.1} parent=83 // pred_fallthru
          _
      $region84: #{tpu_custom_call.1} parent=5 // pred_fallthru
        _
      %p2257 = scmp.le.s32.totalorder 2, %s33
      // Predicated region
      $region117: #{tpu_custom_call.1} parent=5 // pred_check
        %p2258 = pneg %p2257
      $region118: #{tpu_custom_call.1} parent=5 // pred_check_branch
        %2260 = sbr.rel (%p2258) target = $region120
      $region119: #{tpu_custom_call.1} parent=5 // pred_region
        %s2261 = ssub.s32 %s33, 2
        // Predicated region
        $region121: #{tpu_custom_call.1} parent=119 // pred_check
          %p2262 = pneg %p408
        $region122: #{tpu_custom_call.1} parent=119 // pred_check_branch
          %2264 = sbr.rel (%p2262) target = $region124
        $region123: #{tpu_custom_call.1} parent=119 // pred_region
          %s2265 = sand.u32 %s393, 1
          %s2266 = scalar_lea.sflag [#allocation4], %s2265
          %s2267 = sand.u32 %s393, 1
          %s2268 = smul.addr %s2267, 8
          %s2269 = scalar_lea.vmem [#allocation14], %s2268
          %2270 = dma.done %s2266, 128
        $region124: #{tpu_custom_call.1} parent=119 // pred_fallthru
          _
      $region120: #{tpu_custom_call.1} parent=5 // pred_fallthru
        _
    $region6: #{tpu_custom_call.1} parent=1 // loop_footer
      %s37 = sadd.s32 1, %s33
    $region7: #{tpu_custom_call.1} parent=1 // loop_footer_branch
      %32 = sbr.rel target = $region3
    $region8: #{tpu_custom_call.1} parent=1 // loop_exit
      _
    %2271 = vsyncpa [#allocation3], 1
    %s2272 = scalar_lea.sflag [#allocation3], 1
    %2273 = vsyncpa %s2272, 1
    %2274 = vsyncpa [#allocation6], 1
    %s2275 = scalar_lea.sflag [#allocation6], 1
    %2276 = vsyncpa %s2275, 1
    %2277 = vsyncpa [#allocation9], 1
    %2278 = vsyncpa [#allocation12], 1
    %2279 = vsyncpa [#allocation4], 1
    %s2280 = scalar_lea.sflag [#allocation4], 1
    %2281 = vsyncpa %s2280, 1

</llo_original>
